<compile_context>
chip_gen: v7x
topology: tpu7x:2x2x1
jax: 0.10.0
libtpu: 0.0.40
codegen_flags: <defaults>
</compile_context>

<pallas_src>
import functools

import jax
import jax.numpy as jnp
from jax import lax
from jax.experimental import pallas as pl
from jax.experimental.pallas import tpu as pltpu

KSIZE = 3
PAD = 1
BN_EPS = 1e-5
LANE = 128
MIN_TILE = 256
MAX_TILE = 4096


def _round_up(a, b):
    return (a + b - 1) // b * b


def _vmem_capacity_bytes():
    try:
        return int(pltpu.get_tpu_info().vmem_capacity_bytes)
    except Exception:
        return 64 * 1024 * 1024  # conservative fallback: v7x per-TC VMEM


VMEM_CAP = _vmem_capacity_bytes()


def _pick_tile(kdim, cp, npix):
    """Largest row tile whose double-buffered streams + f32 temporaries fit VMEM."""
    budget = int(VMEM_CAP * 0.55)                       # headroom for compiler temporaries
    fixed = 2 * kdim * cp * 2                           # double-buffered bf16 weight block
    per_row = 2 * ((kdim + KSIZE * KSIZE) * 2           # xcols + mcols streams (bf16, 2x buf)
                   + cp * 2                             # bf16 h_pc stream (2x buf)
                   + cp * 4)                            # f32 pass-2 output stream (2x buf)
    per_row += cp * 12                                  # in-kernel f32 temporaries (out, h, h*h)
    tile = (budget - fixed) // max(per_row, 1)
    tile = max(MIN_TILE, min(MAX_TILE, tile))
    tile = min(tile, _round_up(npix, 8))
    return max(8, (tile // 8) * 8)


# ---------------------------------------------------------------------------
# Pass 1: partial conv (MXU) + hole renormalization + per-tile BN partial stats.
# ---------------------------------------------------------------------------
def _pconv_stats_kernel(cin, xcols_ref, mcols_ref, w_ref, h_ref, stats_ref):
    """Per row tile (grid axis is fully parallel -> megacore friendly):
         xcols_ref : (T, Cin*9)  bf16  im2col of (x * mask)
         mcols_ref : (T, 9)      bf16  im2col of the single-channel binary mask
         w_ref     : (Cin*9, Cp) bf16  flattened conv weight
       Outputs:
         h_ref     : (T, Cp)     bf16  partial-conv output (pre-BN), f32 accumulation
         stats_ref : (8, Cp)     f32   per-tile partials: row0 = sum(h), row1 = sum(h*h)
    """
    # Masking was applied at 1x size in the wrapper (commutes with im2col), so the conv is
    # one MXU matmul with f32 accumulation.
    out = jnp.dot(xcols_ref[...], w_ref[...],
                  preferred_element_type=jnp.float32)            # (T, Cp) f32

    # mask_conv (all-ones weights, Cin-replicated mask) == cin * window-sum(mask).
    msum = jnp.sum(mcols_ref[...].astype(jnp.float32), axis=1, keepdims=True)   # (T, 1)
    valid = msum > 0.0
    mask_sum = jnp.where(valid, msum * float(cin), 1.0)
    # One reciprocal per pixel on the EUP (free slot); holes get 0 so h is zeroed there.
    inv = jnp.where(valid, pl.reciprocal(mask_sum, approx=True), 0.0)
    h = out * inv                                                # (T, Cp) f32

    h_ref[...] = h.astype(h_ref.dtype)

    # Per-tile BN partial statistics (padded rows are holes -> contribute exact zeros).
    stats_ref[...] = jnp.zeros_like(stats_ref)
    stats_ref[0:1, :] = jnp.sum(h, axis=0, keepdims=True)
    stats_ref[1:2, :] = jnp.sum(h * h, axis=0, keepdims=True)


# ---------------------------------------------------------------------------
# Pass 2: apply hoisted BN scale/shift + ReLU (pure streamed FMA).
# ---------------------------------------------------------------------------
def _bn_relu_kernel(h_ref, scale_ref, shift_ref, o_ref):
    h = h_ref[...].astype(jnp.float32)                           # (T, Cp)
    o_ref[...] = jnp.maximum(h * scale_ref[...] + shift_ref[...], 0.0).astype(o_ref.dtype)


# ---------------------------------------------------------------------------
# Wrapper: layout glue only (im2col, padding, NCHW <-> row-major reshapes).
# ---------------------------------------------------------------------------
def _im2col_3x3(x):
    """(N, C, H, W) -> (N*H*W, C*9), padding=1, stride=1, column order (c, ky, kx)."""
    n, c, h, w = x.shape
    xp = jnp.pad(x, ((0, 0), (0, 0), (PAD, PAD), (PAD, PAD)))
    taps = [xp[:, :, ky:ky + h, kx:kx + w]
            for ky in range(KSIZE) for kx in range(KSIZE)]       # each (N, C, H, W)
    cols = jnp.stack(taps, axis=2)                               # (N, C, 9, H, W)
    return cols.transpose(0, 3, 4, 1, 2).reshape(n * h * w, c * KSIZE * KSIZE)


@functools.partial(jax.jit, static_argnames=("out_ch",))
def pcbactiv_forward(x, input_mask, weight, gamma, beta, *, out_ch):
    """PCBActiv forward.  x: (N, Cin, H, W), input_mask: (N, Cm>=2, H, W)."""
    n, cin, h, w = x.shape
    npix = n * h * w
    kdim = cin * KSIZE * KSIZE
    # Lane-dense padding only pays for itself when out_ch >= 128; narrow layers keep the
    # true Cout (full-extent last block dim, masked stores).
    cp = _round_up(out_ch, LANE) if out_ch >= LANE else out_ch

    # Mask prep: channel 1, applied to x at 1x size (commutes with im2col), so the kernel
    # streams exactly one bf16 copy of the masked input plus a 9-lane mask stream.
    m1 = input_mask[:, 1:2, :, :]                                # (N, 1, H, W)
    xm = x * m1

    # TODO(synk): replace this wrapper-side im2col with in-kernel halo-DMA im2col.
    xcols = _im2col_3x3(xm).astype(jnp.bfloat16)                 # (Npix, Cin*9) bf16
    mcols_f32 = _im2col_3x3(m1)                                  # (Npix, 9)     f32
    # new_mask is derived here (not stored by the kernel): 9-lane read vs 128-lane write.
    new_mask_flat = (jnp.sum(mcols_f32, axis=1) > 0.0).astype(x.dtype)   # (Npix,)
    mcols = mcols_f32.astype(jnp.bfloat16)                       # binary -> exact in bf16

    w_mat = weight.transpose(1, 2, 3, 0).reshape(kdim, out_ch).astype(jnp.bfloat16)
    w_mat = jnp.pad(w_mat, ((0, 0), (0, cp - out_ch)))           # (Kdim, Cp)
    gamma_p = jnp.pad(gamma, (0, cp - out_ch))                   # (Cp,)
    beta_p = jnp.pad(beta, (0, cp - out_ch))                     # (Cp,)

    # Row tiling sized from the working set and the generation's VMEM capacity.
    tile = _pick_tile(kdim, cp, npix)
    npix_pad = _round_up(npix, tile)
    if npix_pad != npix:
        xcols = jnp.pad(xcols, ((0, npix_pad - npix), (0, 0)))
        mcols = jnp.pad(mcols, ((0, npix_pad - npix), (0, 0)))
    nt = npix_pad // tile

    vmem_cap = int(VMEM_CAP * 0.75)

    # --- Pass 1: partial conv + per-tile BN partials (fully parallel over row tiles).
    h_pc, stats_all = pl.pallas_call(
        functools.partial(_pconv_stats_kernel, cin),
        out_shape=(jax.ShapeDtypeStruct((npix_pad, cp), jnp.bfloat16),
                   jax.ShapeDtypeStruct((nt * 8, cp), jnp.float32)),
        grid=(nt,),
        in_specs=[pl.BlockSpec((tile, kdim), lambda i: (i, 0)),
                  pl.BlockSpec((tile, KSIZE * KSIZE), lambda i: (i, 0)),
                  pl.BlockSpec((kdim, cp), lambda i: (0, 0))],
        out_specs=(pl.BlockSpec((tile, cp), lambda i: (i, 0)),
                   pl.BlockSpec((8, cp), lambda i: (i, 0))),
        compiler_params=pltpu.CompilerParams(
            dimension_semantics=("parallel",),
            vmem_limit_bytes=vmem_cap),
    )(xcols, mcols, w_mat)

    # --- Reduce the per-tile partials and hoist the BN scale/shift (plain JAX, tiny).
    stats3 = stats_all.reshape(nt, 8, cp)
    s = jnp.sum(stats3[:, 0, :], axis=0)                         # (Cp,)
    ss = jnp.sum(stats3[:, 1, :], axis=0)                        # (Cp,)
    mean = s / float(npix)
    var = jnp.maximum(ss / float(npix) - mean * mean, 0.0)       # guard cancellation
    scale = gamma_p * lax.rsqrt(var + BN_EPS)                    # (Cp,)
    shift = beta_p - mean * scale                                # (Cp,)
    scale2 = scale.reshape(1, cp)
    shift2 = shift.reshape(1, cp)

    # --- Pass 2: streamed per-channel FMA + ReLU, fully parallel over row tiles.
    h_flat = pl.pallas_call(
        _bn_relu_kernel,
        out_shape=jax.ShapeDtypeStruct((npix_pad, cp), jnp.float32),
        grid=(nt,),
        in_specs=[pl.BlockSpec((tile, cp), lambda i: (i, 0)),
                  pl.BlockSpec((1, cp), lambda i: (0, 0)),
                  pl.BlockSpec((1, cp), lambda i: (0, 0))],
        out_specs=pl.BlockSpec((tile, cp), lambda i: (i, 0)),
        compiler_params=pltpu.CompilerParams(
            dimension_semantics=("parallel",),
            vmem_limit_bytes=vmem_cap),
    )(h_pc, scale2, shift2)

    # Back to NCHW; drop row/channel padding; broadcast new_mask to Cout.
    h_out = h_flat[:npix, :out_ch].reshape(n, h, w, out_ch).transpose(0, 3, 1, 2)
    nm = new_mask_flat.reshape(n, 1, h, w)
    nm_out = jnp.broadcast_to(nm, (n, out_ch, h, w))
    return h_out, nm_out


# ---------------------------------------------------------------------------
# Plain-JAX reference mirroring the PyTorch forward (conv operands cast to bf16 and the
# pre-BN intermediate rounded to bf16, to match the kernel's precision choices; all
# accumulation stays f32).
# ---------------------------------------------------------------------------
def _reference(x, input_mask, weight, gamma, beta):
    m = jnp.broadcast_to(input_mask[:, 1:2], x.shape)
    xm = (x * m).astype(jnp.bfloat16).astype(jnp.float32)
    wb = weight.astype(jnp.bfloat16).astype(jnp.float32)
    dn = ("NCHW", "OIHW", "NCHW")
    out = lax.conv_general_dilated(xm, wb, (1, 1), ((PAD, PAD), (PAD, PAD)),
                                   dimension_numbers=dn)
    out_mask = lax.conv_general_dilated(m, jnp.ones_like(weight), (1, 1),
                                        ((PAD, PAD), (PAD, PAD)),
                                        dimension_numbers=dn)
    holes = out_mask == 0
    mask_sum = jnp.where(holes, 1.0, out_mask)
    h_pc = jnp.where(holes, 0.0, out / mask_sum)
    new_mask = jnp.where(holes, 0.0, 1.0)
    mean = h_pc.mean(axis=(0, 2, 3), keepdims=True)
    var = ((h_pc - mean) ** 2).mean(axis=(0, 2, 3), keepdims=True)
    h_q = h_pc.astype(jnp.bfloat16).astype(jnp.float32)          # kernel stores h_pc as bf16
    h_bn = (h_q - mean) / jnp.sqrt(var + BN_EPS) * gamma.reshape(1, -1, 1, 1) \
           + beta.reshape(1, -1, 1, 1)
    return jnp.maximum(h_bn, 0.0), jnp.broadcast_to(new_mask, h_pc.shape)


if __name__ == "__main__":
    N, IN_CH, OUT_CH, H, W = 2, 4, 8, 16, 16
    MASK_CH = 3  # forward slices mask[:, 1:2], so >= 2 channels

    key = jax.random.PRNGKey(0)
    kx, km, kw = jax.random.split(key, 3)

    x = jax.random.normal(kx, (N, IN_CH, H, W), dtype=jnp.float32)
    input_mask = (jax.random.uniform(km, (N, MASK_CH, H, W)) > 0.7).astype(jnp.float32)

    # Kaiming-normal-like conv weight; BatchNorm2d defaults; conv_bias=False -> no bias.
    fan_in = IN_CH * KSIZE * KSIZE
    weight = jax.random.normal(kw, (OUT_CH, IN_CH, KSIZE, KSIZE),
                               dtype=jnp.float32) * jnp.sqrt(2.0 / fan_in)
    gamma = jnp.ones((OUT_CH,), jnp.float32)
    beta = jnp.zeros((OUT_CH,), jnp.float32)

    h_out, new_mask = pcbactiv_forward(x, input_mask, weight, gamma, beta,
                                       out_ch=OUT_CH)
    jax.block_until_ready((h_out, new_mask))

    h_ref, nm_ref = _reference(x, input_mask, weight, gamma, beta)
    assert h_out.shape == (N, OUT_CH, H, W) and new_mask.shape == (N, OUT_CH, H, W)
    # Tolerance covers the EUP approx-reciprocal, bf16 intermediate rounding (mirrored in
    # the reference), single-pass variance, and MXU sum order.
    assert jnp.allclose(h_out, h_ref, rtol=3e-2, atol=3e-2)
    assert jnp.allclose(new_mask, nm_ref)

    print("KERNEL_OK")
</pallas_src>

<mosaic_0001>
module attributes {stable_mosaic.version = 11 : i64} {
  func.func @_pconv_stats_kernel(%arg0: i32, %arg1: memref<512x36xbf16, #tpu.memory_space<vmem>>, %arg2: memref<512x9xbf16, #tpu.memory_space<vmem>>, %arg3: memref<36x8xbf16, #tpu.memory_space<vmem>>, %arg4: memref<512x8xbf16, #tpu.memory_space<vmem>>, %arg5: memref<8x8xf32, #tpu.memory_space<vmem>>) attributes {dimension_semantics = [#tpu.dimension_semantics<parallel>], iteration_bounds = array<i64: 1>, scalar_prefetch = 0 : i64, scratch_operands = 0 : i64, tpu.core_type = #tpu.core_type<tc>, window_params = [{transform_indices = @transform_0, window_bounds = array<i64: 512, 36>}, {transform_indices = @transform_1, window_bounds = array<i64: 512, 9>}, {pipeline_mode = #tpu.pipeline_mode<synchronous>, transform_indices = @transform_2, window_bounds = array<i64: 36, 8>}, {transform_indices = @transform_3, window_bounds = array<i64: 512, 8>}, {transform_indices = @transform_4, window_bounds = array<i64: 8, 8>}]} {
    %c0 = arith.constant 0 : index
    %c0_0 = arith.constant 0 : index
    %0 = vector.load %arg1[%c0, %c0_0] : memref<512x36xbf16, #tpu.memory_space<vmem>>, vector<512x36xbf16>
    %c0_1 = arith.constant 0 : index
    %c0_2 = arith.constant 0 : index
    %1 = vector.load %arg3[%c0_1, %c0_2] : memref<36x8xbf16, #tpu.memory_space<vmem>>, vector<36x8xbf16>
    %cst = arith.constant dense<0.000000e+00> : vector<512x8xf32>
    %2 = tpu.matmul %0, %1, %cst {dimension_numbers = #tpu.dot_dimension_numbers<[1], [0], [0], [1], [0, 0, 1, 1], [], []>} : vector<512x36xbf16>, vector<36x8xbf16>, vector<512x8xf32> -> vector<512x8xf32>
    %c0_3 = arith.constant 0 : index
    %c0_4 = arith.constant 0 : index
    %3 = vector.load %arg2[%c0_3, %c0_4] : memref<512x9xbf16, #tpu.memory_space<vmem>>, vector<512x9xbf16>
    %4 = arith.extf %3 : vector<512x9xbf16> to vector<512x9xf32>
    %cst_5 = arith.constant dense<0.000000e+00> : vector<512xf32>
    %5 = vector.multi_reduction <add>, %4, %cst_5 [1] : vector<512x9xf32> to vector<512xf32>
    %6 = vector.shape_cast %5 : vector<512xf32> to vector<512x1xf32>
    %cst_6 = arith.constant 0.000000e+00 : f32
    %7 = vector.broadcast %cst_6 : f32 to vector<512x1xf32>
    %8 = arith.cmpf ogt, %6, %7 : vector<512x1xf32>
    %cst_7 = arith.constant 4.000000e+00 : f32
    %9 = vector.broadcast %cst_7 : f32 to vector<512x1xf32>
    %10 = arith.mulf %6, %9 : vector<512x1xf32>
    %cst_8 = arith.constant 1.000000e+00 : f32
    %11 = vector.broadcast %cst_8 : f32 to vector<512x1xf32>
    %12 = arith.select %8, %10, %11 : vector<512x1xi1>, vector<512x1xf32>
    %13 = tpu.reciprocal %12 {approx = true} : vector<512x1xf32> -> vector<512x1xf32>
    %cst_9 = arith.constant 0.000000e+00 : f32
    %14 = vector.broadcast %cst_9 : f32 to vector<512x1xf32>
    %15 = arith.select %8, %13, %14 : vector<512x1xi1>, vector<512x1xf32>
    %16 = vector.broadcast %15 : vector<512x1xf32> to vector<512x8xf32>
    %17 = arith.mulf %2, %16 : vector<512x8xf32>
    %18 = arith.truncf %17 : vector<512x8xf32> to vector<512x8xbf16>
    %c0_10 = arith.constant 0 : index
    %c0_11 = arith.constant 0 : index
    %19 = vector.load %arg4[%c0_10, %c0_11] : memref<512x8xbf16, #tpu.memory_space<vmem>>, vector<512x8xbf16>
    tpu.vector_store %arg4[%c0_10, %c0_11], %18 {strides = array<i32>} : memref<512x8xbf16, #tpu.memory_space<vmem>>, vector<512x8xbf16>,
    %cst_12 = arith.constant 0.000000e+00 : f32
    %20 = vector.broadcast %cst_12 : f32 to vector<8x8xf32>
    %c0_13 = arith.constant 0 : index
    %c0_14 = arith.constant 0 : index
    %21 = vector.load %arg5[%c0_13, %c0_14] : memref<8x8xf32, #tpu.memory_space<vmem>>, vector<8x8xf32>
    tpu.vector_store %arg5[%c0_13, %c0_14], %20 {strides = array<i32>} : memref<8x8xf32, #tpu.memory_space<vmem>>, vector<8x8xf32>,
    %cst_15 = arith.constant dense<0.000000e+00> : vector<8xf32>
    %22 = vector.multi_reduction <add>, %17, %cst_15 [0] : vector<512x8xf32> to vector<8xf32>
    %23 = vector.shape_cast %22 : vector<8xf32> to vector<1x8xf32>
    %c0_16 = arith.constant 0 : index
    %c0_17 = arith.constant 0 : index
    %24 = vector.load %arg5[%c0_16, %c0_17] : memref<8x8xf32, #tpu.memory_space<vmem>>, vector<1x8xf32>
    tpu.vector_store %arg5[%c0_16, %c0_17], %23 {strides = array<i32>} : memref<8x8xf32, #tpu.memory_space<vmem>>, vector<1x8xf32>,
    %25 = arith.mulf %17, %17 : vector<512x8xf32>
    %cst_18 = arith.constant dense<0.000000e+00> : vector<8xf32>
    %26 = vector.multi_reduction <add>, %25, %cst_18 [0] : vector<512x8xf32> to vector<8xf32>
    %27 = vector.shape_cast %26 : vector<8xf32> to vector<1x8xf32>
    %c1 = arith.constant 1 : index
    %c0_19 = arith.constant 0 : index
    %28 = vector.load %arg5[%c1, %c0_19] : memref<8x8xf32, #tpu.memory_space<vmem>>, vector<1x8xf32>
    tpu.vector_store %arg5[%c1, %c0_19], %27 {strides = array<i32>} : memref<8x8xf32, #tpu.memory_space<vmem>>, vector<1x8xf32>,
    return
  }
  func.func @transform_0(%arg0: i32) -> (i32, i32) {
    %c0_i32 = arith.constant 0 : i32
    %c0_i32_0 = arith.constant 0 : i32
    return %arg0, %c0_i32 : i32, i32
  }
  func.func @transform_1(%arg0: i32) -> (i32, i32) {
    %c0_i32 = arith.constant 0 : i32
    %c0_i32_0 = arith.constant 0 : i32
    return %arg0, %c0_i32 : i32, i32
  }
  func.func @transform_2(%arg0: i32) -> (i32, i32) {
    %c0_i32 = arith.constant 0 : i32
    %c0_i32_0 = arith.constant 0 : i32
    %c0_i32_1 = arith.constant 0 : i32
    return %c0_i32, %c0_i32_0 : i32, i32
  }
  func.func @transform_3(%arg0: i32) -> (i32, i32) {
    %c0_i32 = arith.constant 0 : i32
    %c0_i32_0 = arith.constant 0 : i32
    return %arg0, %c0_i32 : i32, i32
  }
  func.func @transform_4(%arg0: i32) -> (i32, i32) {
    %c0_i32 = arith.constant 0 : i32
    %c0_i32_0 = arith.constant 0 : i32
    return %arg0, %c0_i32 : i32, i32
  }
}

module attributes {stable_mosaic.version = 11 : i64} {
  func.func @_bn_relu_kernel(%arg0: i32, %arg1: memref<512x8xbf16, #tpu.memory_space<vmem>>, %arg2: memref<1x8xf32, #tpu.memory_space<vmem>>, %arg3: memref<1x8xf32, #tpu.memory_space<vmem>>, %arg4: memref<512x8xf32, #tpu.memory_space<vmem>>) attributes {dimension_semantics = [#tpu.dimension_semantics<parallel>], iteration_bounds = array<i64: 1>, scalar_prefetch = 0 : i64, scratch_operands = 0 : i64, tpu.core_type = #tpu.core_type<tc>, window_params = [{transform_indices = @transform_0, window_bounds = array<i64: 512, 8>}, {pipeline_mode = #tpu.pipeline_mode<synchronous>, transform_indices = @transform_1, window_bounds = array<i64: 1, 8>}, {pipeline_mode = #tpu.pipeline_mode<synchronous>, transform_indices = @transform_2, window_bounds = array<i64: 1, 8>}, {transform_indices = @transform_3, window_bounds = array<i64: 512, 8>}]} {
    %c0 = arith.constant 0 : index
    %c0_0 = arith.constant 0 : index
    %0 = vector.load %arg1[%c0, %c0_0] : memref<512x8xbf16, #tpu.memory_space<vmem>>, vector<512x8xbf16>
    %1 = arith.extf %0 : vector<512x8xbf16> to vector<512x8xf32>
    %c0_1 = arith.constant 0 : index
    %c0_2 = arith.constant 0 : index
    %2 = vector.load %arg2[%c0_1, %c0_2] : memref<1x8xf32, #tpu.memory_space<vmem>>, vector<1x8xf32>
    %3 = vector.broadcast %2 : vector<1x8xf32> to vector<512x8xf32>
    %4 = arith.mulf %1, %3 : vector<512x8xf32>
    %c0_3 = arith.constant 0 : index
    %c0_4 = arith.constant 0 : index
    %5 = vector.load %arg3[%c0_3, %c0_4] : memref<1x8xf32, #tpu.memory_space<vmem>>, vector<1x8xf32>
    %6 = vector.broadcast %5 : vector<1x8xf32> to vector<512x8xf32>
    %7 = arith.addf %4, %6 : vector<512x8xf32>
    %cst = arith.constant 0.000000e+00 : f32
    %8 = vector.broadcast %cst : f32 to vector<512x8xf32>
    %9 = arith.maximumf %7, %8 : vector<512x8xf32>
    %c0_5 = arith.constant 0 : index
    %c0_6 = arith.constant 0 : index
    %10 = vector.load %arg4[%c0_5, %c0_6] : memref<512x8xf32, #tpu.memory_space<vmem>>, vector<512x8xf32>
    tpu.vector_store %arg4[%c0_5, %c0_6], %9 {strides = array<i32>} : memref<512x8xf32, #tpu.memory_space<vmem>>, vector<512x8xf32>,
    return
  }
  func.func @transform_0(%arg0: i32) -> (i32, i32) {
    %c0_i32 = arith.constant 0 : i32
    %c0_i32_0 = arith.constant 0 : i32
    return %arg0, %c0_i32 : i32, i32
  }
  func.func @transform_1(%arg0: i32) -> (i32, i32) {
    %c0_i32 = arith.constant 0 : i32
    %c0_i32_0 = arith.constant 0 : i32
    %c0_i32_1 = arith.constant 0 : i32
    return %c0_i32, %c0_i32_0 : i32, i32
  }
  func.func @transform_2(%arg0: i32) -> (i32, i32) {
    %c0_i32 = arith.constant 0 : i32
    %c0_i32_0 = arith.constant 0 : i32
    %c0_i32_1 = arith.constant 0 : i32
    return %c0_i32, %c0_i32_0 : i32, i32
  }
  func.func @transform_3(%arg0: i32) -> (i32, i32) {
    %c0_i32 = arith.constant 0 : i32
    %c0_i32_0 = arith.constant 0 : i32
    return %arg0, %c0_i32 : i32, i32
  }
}

</mosaic_0001>

<llo_original>
// kernel: pcbactiv_forward.3
$region0: #{pcbactiv_forward.3}
  #allocation0 [shape = 'u32[]', space=smem, size = 0x4, offset = 0x4, fixed_abs, tag = 'smem constant byte address 0x4 - core index']
  #allocation1 [shape = 'u32[144,128]{1,0:T(1,128)}', space=vmem, size = 0x12000, scoped, tag = 'internal scratch']
  %s0 = inlined_call_operand.vmem [shape: bf16[512,8], index: 0, kind: input, shape index: {}]
  %s1 = inlined_call_operand.vmem [shape: f32[1,8], index: 1, kind: input, shape index: {}]
  %s2 = inlined_call_operand.vmem [shape: f32[1,8], index: 2, kind: input, shape index: {}]
  %s3 = inlined_call_operand.vmem [shape: f32[512,8], index: 3, kind: output, shape index: {}]
  %s4 = sld [smem:[#allocation0]]
  $region22: #{pcbactiv_forward.3} parent=0
    _
  %s6 = ssub.s32 1, %s4
  %s7 = scalar_select 0, %s6, %s4
  // Predicated region
  $region2: #{pcbactiv_forward.3} parent=0 // pred_check
    _
  $region3: #{pcbactiv_forward.3} parent=0 // pred_check_branch
    %9 = sbr.rel (0) target = $region5
  $region4: #{pcbactiv_forward.3} parent=0 // pred_region
    _
  $region5: #{pcbactiv_forward.3} parent=0 // pred_fallthru
    _
  // Predicated region
  $region6: #{pcbactiv_forward.3} parent=0 // pred_check
    _
  $region7: #{pcbactiv_forward.3} parent=0 // pred_check_branch
    %11 = sbr.rel (0) target = $region9
  $region8: #{pcbactiv_forward.3} parent=0 // pred_region
    _
  $region9: #{pcbactiv_forward.3} parent=0 // pred_fallthru
    _
  // Predicated region
  $region10: #{pcbactiv_forward.3} parent=0 // pred_check
    _
  $region11: #{pcbactiv_forward.3} parent=0 // pred_check_branch
    %13 = sbr.rel (0) target = $region13
  $region12: #{pcbactiv_forward.3} parent=0 // pred_region
    _
  $region13: #{pcbactiv_forward.3} parent=0 // pred_fallthru
    _
  %v14 = vld [vmem:[%s0] sm:$0xf]
  %v15 = vld [vmem:[%s0 + $0x4] sm:$0xf]
  %v16 = vld [vmem:[%s0 + $0x8] sm:$0xf]
  %v17 = vld [vmem:[%s0 + $0xc] sm:$0xf]
  %v18 = vld [vmem:[%s0 + $0x10] sm:$0xf]
  %v19 = vld [vmem:[%s0 + $0x14] sm:$0xf]
  %v20 = vld [vmem:[%s0 + $0x18] sm:$0xf]
  %v21 = vld [vmem:[%s0 + $0x1c] sm:$0xf]
  %v22 = vld [vmem:[%s0 + $0x20] sm:$0xf]
  %v23 = vld [vmem:[%s0 + $0x24] sm:$0xf]
  %v24 = vld [vmem:[%s0 + $0x28] sm:$0xf]
  %v25 = vld [vmem:[%s0 + $0x2c] sm:$0xf]
  %v26 = vld [vmem:[%s0 + $0x30] sm:$0xf]
  %v27 = vld [vmem:[%s0 + $0x34] sm:$0xf]
  %v28 = vld [vmem:[%s0 + $0x38] sm:$0xf]
  %v29 = vld [vmem:[%s0 + $0x3c] sm:$0xf]
  %v30 = vld [vmem:[%s0 + $0x40] sm:$0xf]
  %v31 = vld [vmem:[%s0 + $0x44] sm:$0xf]
  %v32 = vld [vmem:[%s0 + $0x48] sm:$0xf]
  %v33 = vld [vmem:[%s0 + $0x4c] sm:$0xf]
  %v34 = vld [vmem:[%s0 + $0x50] sm:$0xf]
  %v35 = vld [vmem:[%s0 + $0x54] sm:$0xf]
  %v36 = vld [vmem:[%s0 + $0x58] sm:$0xf]
  %v37 = vld [vmem:[%s0 + $0x5c] sm:$0xf]
  %v38 = vld [vmem:[%s0 + $0x60] sm:$0xf]
  %v39 = vld [vmem:[%s0 + $0x64] sm:$0xf]
  %v40 = vld [vmem:[%s0 + $0x68] sm:$0xf]
  %v41 = vld [vmem:[%s0 + $0x6c] sm:$0xf]
  %v42 = vld [vmem:[%s0 + $0x70] sm:$0xf]
  %v43 = vld [vmem:[%s0 + $0x74] sm:$0xf]
  %v44 = vld [vmem:[%s0 + $0x78] sm:$0xf]
  %v45 = vld [vmem:[%s0 + $0x7c] sm:$0xf]
  %v46 = vld [vmem:[%s0 + $0x80] sm:$0xf]
  %v47 = vld [vmem:[%s0 + $0x84] sm:$0xf]
  %v48 = vld [vmem:[%s0 + $0x88] sm:$0xf]
  %v49 = vld [vmem:[%s0 + $0x8c] sm:$0xf]
  %v50 = vld [vmem:[%s0 + $0x90] sm:$0xf]
  %v51 = vld [vmem:[%s0 + $0x94] sm:$0xf]
  %v52 = vld [vmem:[%s0 + $0x98] sm:$0xf]
  %v53 = vld [vmem:[%s0 + $0x9c] sm:$0xf]
  %v54 = vld [vmem:[%s0 + $0xa0] sm:$0xf]
  %v55 = vld [vmem:[%s0 + $0xa4] sm:$0xf]
  %v56 = vld [vmem:[%s0 + $0xa8] sm:$0xf]
  %v57 = vld [vmem:[%s0 + $0xac] sm:$0xf]
  %v58 = vld [vmem:[%s0 + $0xb0] sm:$0xf]
  %v59 = vld [vmem:[%s0 + $0xb4] sm:$0xf]
  %v60 = vld [vmem:[%s0 + $0xb8] sm:$0xf]
  %v61 = vld [vmem:[%s0 + $0xbc] sm:$0xf]
  %v62 = vld [vmem:[%s0 + $0xc0] sm:$0xf]
  %v63 = vld [vmem:[%s0 + $0xc4] sm:$0xf]
  %v64 = vld [vmem:[%s0 + $0xc8] sm:$0xf]
  %v65 = vld [vmem:[%s0 + $0xcc] sm:$0xf]
  %v66 = vld [vmem:[%s0 + $0xd0] sm:$0xf]
  %v67 = vld [vmem:[%s0 + $0xd4] sm:$0xf]
  %v68 = vld [vmem:[%s0 + $0xd8] sm:$0xf]
  %v69 = vld [vmem:[%s0 + $0xdc] sm:$0xf]
  %v70 = vld [vmem:[%s0 + $0xe0] sm:$0xf]
  %v71 = vld [vmem:[%s0 + $0xe4] sm:$0xf]
  %v72 = vld [vmem:[%s0 + $0xe8] sm:$0xf]
  %v73 = vld [vmem:[%s0 + $0xec] sm:$0xf]
  %v74 = vld [vmem:[%s0 + $0xf0] sm:$0xf]
  %v75 = vld [vmem:[%s0 + $0xf4] sm:$0xf]
  %v76 = vld [vmem:[%s0 + $0xf8] sm:$0xf]
  %v77 = vld [vmem:[%s0 + $0xfc] sm:$0xf]
  %v78 = vunpack.c.l.bf16 %v14
  %v79 = vunpack.c.l.bf16 %v15
  %v80 = vunpack.c.l.bf16 %v16
  %v81 = vunpack.c.l.bf16 %v17
  %v82 = vunpack.c.l.bf16 %v18
  %v83 = vunpack.c.l.bf16 %v19
  %v84 = vunpack.c.l.bf16 %v20
  %v85 = vunpack.c.l.bf16 %v21
  %v86 = vunpack.c.l.bf16 %v22
  %v87 = vunpack.c.l.bf16 %v23
  %v88 = vunpack.c.l.bf16 %v24
  %v89 = vunpack.c.l.bf16 %v25
  %v90 = vunpack.c.l.bf16 %v26
  %v91 = vunpack.c.l.bf16 %v27
  %v92 = vunpack.c.l.bf16 %v28
  %v93 = vunpack.c.l.bf16 %v29
  %v94 = vunpack.c.l.bf16 %v30
  %v95 = vunpack.c.l.bf16 %v31
  %v96 = vunpack.c.l.bf16 %v32
  %v97 = vunpack.c.l.bf16 %v33
  %v98 = vunpack.c.l.bf16 %v34
  %v99 = vunpack.c.l.bf16 %v35
  %v100 = vunpack.c.l.bf16 %v36
  %v101 = vunpack.c.l.bf16 %v37
  %v102 = vunpack.c.l.bf16 %v38
  %v103 = vunpack.c.l.bf16 %v39
  %v104 = vunpack.c.l.bf16 %v40
  %v105 = vunpack.c.l.bf16 %v41
  %v106 = vunpack.c.l.bf16 %v42
  %v107 = vunpack.c.l.bf16 %v43
  %v108 = vunpack.c.l.bf16 %v44
  %v109 = vunpack.c.l.bf16 %v45
  %v110 = vunpack.c.l.bf16 %v46
  %v111 = vunpack.c.l.bf16 %v47
  %v112 = vunpack.c.l.bf16 %v48
  %v113 = vunpack.c.l.bf16 %v49
  %v114 = vunpack.c.l.bf16 %v50
  %v115 = vunpack.c.l.bf16 %v51
  %v116 = vunpack.c.l.bf16 %v52
  %v117 = vunpack.c.l.bf16 %v53
  %v118 = vunpack.c.l.bf16 %v54
  %v119 = vunpack.c.l.bf16 %v55
  %v120 = vunpack.c.l.bf16 %v56
  %v121 = vunpack.c.l.bf16 %v57
  %v122 = vunpack.c.l.bf16 %v58
  %v123 = vunpack.c.l.bf16 %v59
  %v124 = vunpack.c.l.bf16 %v60
  %v125 = vunpack.c.l.bf16 %v61
  %v126 = vunpack.c.l.bf16 %v62
  %v127 = vunpack.c.l.bf16 %v63
  %v128 = vunpack.c.l.bf16 %v64
  %v129 = vunpack.c.l.bf16 %v65
  %v130 = vunpack.c.l.bf16 %v66
  %v131 = vunpack.c.l.bf16 %v67
  %v132 = vunpack.c.l.bf16 %v68
  %v133 = vunpack.c.l.bf16 %v69
  %v134 = vunpack.c.l.bf16 %v70
  %v135 = vunpack.c.l.bf16 %v71
  %v136 = vunpack.c.l.bf16 %v72
  %v137 = vunpack.c.l.bf16 %v73
  %v138 = vunpack.c.l.bf16 %v74
  %v139 = vunpack.c.l.bf16 %v75
  %v140 = vunpack.c.l.bf16 %v76
  %v141 = vunpack.c.l.bf16 %v77
  %v142 = vld [vmem:[%s1] sm:$0x1]
  %v144 = vlaneseq
  %v145 = vshrl.u32 %v144, 7
  %v146 = vsub.s32 0, %v145
  %v147 = vrot.slane %v142, %v146
  %v149 = vmul.f32 %v78, %v147
  %v150 = vmul.f32 %v79, %v147
  %v151 = vmul.f32 %v80, %v147
  %v152 = vmul.f32 %v81, %v147
  %v153 = vmul.f32 %v82, %v147
  %v154 = vmul.f32 %v83, %v147
  %v155 = vmul.f32 %v84, %v147
  %v156 = vmul.f32 %v85, %v147
  %v157 = vmul.f32 %v86, %v147
  %v158 = vmul.f32 %v87, %v147
  %v159 = vmul.f32 %v88, %v147
  %v160 = vmul.f32 %v89, %v147
  %v161 = vmul.f32 %v90, %v147
  %v162 = vmul.f32 %v91, %v147
  %v163 = vmul.f32 %v92, %v147
  %v164 = vmul.f32 %v93, %v147
  %v165 = vmul.f32 %v94, %v147
  %v166 = vmul.f32 %v95, %v147
  %v167 = vmul.f32 %v96, %v147
  %v168 = vmul.f32 %v97, %v147
  %v169 = vmul.f32 %v98, %v147
  %v170 = vmul.f32 %v99, %v147
  %v171 = vmul.f32 %v100, %v147
  %v172 = vmul.f32 %v101, %v147
  %v173 = vmul.f32 %v102, %v147
  %v174 = vmul.f32 %v103, %v147
  %v175 = vmul.f32 %v104, %v147
  %v176 = vmul.f32 %v105, %v147
  %v177 = vmul.f32 %v106, %v147
  %v178 = vmul.f32 %v107, %v147
  %v179 = vmul.f32 %v108, %v147
  %v180 = vmul.f32 %v109, %v147
  %v181 = vmul.f32 %v110, %v147
  %v182 = vmul.f32 %v111, %v147
  %v183 = vmul.f32 %v112, %v147
  %v184 = vmul.f32 %v113, %v147
  %v185 = vmul.f32 %v114, %v147
  %v186 = vmul.f32 %v115, %v147
  %v187 = vmul.f32 %v116, %v147
  %v188 = vmul.f32 %v117, %v147
  %v189 = vmul.f32 %v118, %v147
  %v190 = vmul.f32 %v119, %v147
  %v191 = vmul.f32 %v120, %v147
  %v192 = vmul.f32 %v121, %v147
  %v193 = vmul.f32 %v122, %v147
  %v194 = vmul.f32 %v123, %v147
  %v195 = vmul.f32 %v124, %v147
  %v196 = vmul.f32 %v125, %v147
  %v197 = vmul.f32 %v126, %v147
  %v198 = vmul.f32 %v127, %v147
  %v199 = vmul.f32 %v128, %v147
  %v200 = vmul.f32 %v129, %v147
  %v201 = vmul.f32 %v130, %v147
  %v202 = vmul.f32 %v131, %v147
  %v203 = vmul.f32 %v132, %v147
  %v204 = vmul.f32 %v133, %v147
  %v205 = vmul.f32 %v134, %v147
  %v206 = vmul.f32 %v135, %v147
  %v207 = vmul.f32 %v136, %v147
  %v208 = vmul.f32 %v137, %v147
  %v209 = vmul.f32 %v138, %v147
  %v210 = vmul.f32 %v139, %v147
  %v211 = vmul.f32 %v140, %v147
  %v212 = vmul.f32 %v141, %v147
  %v213 = vld [vmem:[%s2] sm:$0x1]
  %v215 = vlaneseq
  %v216 = vshrl.u32 %v215, 7
  %v217 = vsub.s32 0, %v216
  %v218 = vrot.slane %v213, %v217
  %v220 = vadd.f32 %v149, %v218
  %v221 = vadd.f32 %v150, %v218
  %v222 = vadd.f32 %v151, %v218
  %v223 = vadd.f32 %v152, %v218
  %v224 = vadd.f32 %v153, %v218
  %v225 = vadd.f32 %v154, %v218
  %v226 = vadd.f32 %v155, %v218
  %v227 = vadd.f32 %v156, %v218
  %v228 = vadd.f32 %v157, %v218
  %v229 = vadd.f32 %v158, %v218
  %v230 = vadd.f32 %v159, %v218
  %v231 = vadd.f32 %v160, %v218
  %v232 = vadd.f32 %v161, %v218
  %v233 = vadd.f32 %v162, %v218
  %v234 = vadd.f32 %v163, %v218
  %v235 = vadd.f32 %v164, %v218
  %v236 = vadd.f32 %v165, %v218
  %v237 = vadd.f32 %v166, %v218
  %v238 = vadd.f32 %v167, %v218
  %v239 = vadd.f32 %v168, %v218
  %v240 = vadd.f32 %v169, %v218
  %v241 = vadd.f32 %v170, %v218
  %v242 = vadd.f32 %v171, %v218
  %v243 = vadd.f32 %v172, %v218
  %v244 = vadd.f32 %v173, %v218
  %v245 = vadd.f32 %v174, %v218
  %v246 = vadd.f32 %v175, %v218
  %v247 = vadd.f32 %v176, %v218
  %v248 = vadd.f32 %v177, %v218
  %v249 = vadd.f32 %v178, %v218
  %v250 = vadd.f32 %v179, %v218
  %v251 = vadd.f32 %v180, %v218
  %v252 = vadd.f32 %v181, %v218
  %v253 = vadd.f32 %v182, %v218
  %v254 = vadd.f32 %v183, %v218
  %v255 = vadd.f32 %v184, %v218
  %v256 = vadd.f32 %v185, %v218
  %v257 = vadd.f32 %v186, %v218
  %v258 = vadd.f32 %v187, %v218
  %v259 = vadd.f32 %v188, %v218
  %v260 = vadd.f32 %v189, %v218
  %v261 = vadd.f32 %v190, %v218
  %v262 = vadd.f32 %v191, %v218
  %v263 = vadd.f32 %v192, %v218
  %v264 = vadd.f32 %v193, %v218
  %v265 = vadd.f32 %v194, %v218
  %v266 = vadd.f32 %v195, %v218
  %v267 = vadd.f32 %v196, %v218
  %v268 = vadd.f32 %v197, %v218
  %v269 = vadd.f32 %v198, %v218
  %v270 = vadd.f32 %v199, %v218
  %v271 = vadd.f32 %v200, %v218
  %v272 = vadd.f32 %v201, %v218
  %v273 = vadd.f32 %v202, %v218
  %v274 = vadd.f32 %v203, %v218
  %v275 = vadd.f32 %v204, %v218
  %v276 = vadd.f32 %v205, %v218
  %v277 = vadd.f32 %v206, %v218
  %v278 = vadd.f32 %v207, %v218
  %v279 = vadd.f32 %v208, %v218
  %v280 = vadd.f32 %v209, %v218
  %v281 = vadd.f32 %v210, %v218
  %v282 = vadd.f32 %v211, %v218
  %v283 = vadd.f32 %v212, %v218
  %v284 = vmax.f32 %v220, 0.0
  %v285 = vmax.f32 %v221, 0.0
  %v286 = vmax.f32 %v222, 0.0
  %v287 = vmax.f32 %v223, 0.0
  %v288 = vmax.f32 %v224, 0.0
  %v289 = vmax.f32 %v225, 0.0
  %v290 = vmax.f32 %v226, 0.0
  %v291 = vmax.f32 %v227, 0.0
  %v292 = vmax.f32 %v228, 0.0
  %v293 = vmax.f32 %v229, 0.0
  %v294 = vmax.f32 %v230, 0.0
  %v295 = vmax.f32 %v231, 0.0
  %v296 = vmax.f32 %v232, 0.0
  %v297 = vmax.f32 %v233, 0.0
  %v298 = vmax.f32 %v234, 0.0
  %v299 = vmax.f32 %v235, 0.0
  %v300 = vmax.f32 %v236, 0.0
  %v301 = vmax.f32 %v237, 0.0
  %v302 = vmax.f32 %v238, 0.0
  %v303 = vmax.f32 %v239, 0.0
  %v304 = vmax.f32 %v240, 0.0
  %v305 = vmax.f32 %v241, 0.0
  %v306 = vmax.f32 %v242, 0.0
  %v307 = vmax.f32 %v243, 0.0
  %v308 = vmax.f32 %v244, 0.0
  %v309 = vmax.f32 %v245, 0.0
  %v310 = vmax.f32 %v246, 0.0
  %v311 = vmax.f32 %v247, 0.0
  %v312 = vmax.f32 %v248, 0.0
  %v313 = vmax.f32 %v249, 0.0
  %v314 = vmax.f32 %v250, 0.0
  %v315 = vmax.f32 %v251, 0.0
  %v316 = vmax.f32 %v252, 0.0
  %v317 = vmax.f32 %v253, 0.0
  %v318 = vmax.f32 %v254, 0.0
  %v319 = vmax.f32 %v255, 0.0
  %v320 = vmax.f32 %v256, 0.0
  %v321 = vmax.f32 %v257, 0.0
  %v322 = vmax.f32 %v258, 0.0
  %v323 = vmax.f32 %v259, 0.0
  %v324 = vmax.f32 %v260, 0.0
  %v325 = vmax.f32 %v261, 0.0
  %v326 = vmax.f32 %v262, 0.0
  %v327 = vmax.f32 %v263, 0.0
  %v328 = vmax.f32 %v264, 0.0
  %v329 = vmax.f32 %v265, 0.0
  %v330 = vmax.f32 %v266, 0.0
  %v331 = vmax.f32 %v267, 0.0
  %v332 = vmax.f32 %v268, 0.0
  %v333 = vmax.f32 %v269, 0.0
  %v334 = vmax.f32 %v270, 0.0
  %v335 = vmax.f32 %v271, 0.0
  %v336 = vmax.f32 %v272, 0.0
  %v337 = vmax.f32 %v273, 0.0
  %v338 = vmax.f32 %v274, 0.0
  %v339 = vmax.f32 %v275, 0.0
  %v340 = vmax.f32 %v276, 0.0
  %v341 = vmax.f32 %v277, 0.0
  %v342 = vmax.f32 %v278, 0.0
  %v343 = vmax.f32 %v279, 0.0
  %v344 = vmax.f32 %v280, 0.0
  %v345 = vmax.f32 %v281, 0.0
  %v346 = vmax.f32 %v282, 0.0
  %v347 = vmax.f32 %v283, 0.0
  %vm348 = vcmask 64512
  %349 = vst.msk [vmem:[%s3] sm:$0xff] %vm348, %v284
  %350 = vst.msk [vmem:[%s3 + $0x8] sm:$0xff] %vm348, %v285
  %351 = vst.msk [vmem:[%s3 + $0x10] sm:$0xff] %vm348, %v286
  %352 = vst.msk [vmem:[%s3 + $0x18] sm:$0xff] %vm348, %v287
  %353 = vst.msk [vmem:[%s3 + $0x20] sm:$0xff] %vm348, %v288
  %354 = vst.msk [vmem:[%s3 + $0x28] sm:$0xff] %vm348, %v289
  %355 = vst.msk [vmem:[%s3 + $0x30] sm:$0xff] %vm348, %v290
  %356 = vst.msk [vmem:[%s3 + $0x38] sm:$0xff] %vm348, %v291
  %357 = vst.msk [vmem:[%s3 + $0x40] sm:$0xff] %vm348, %v292
  %358 = vst.msk [vmem:[%s3 + $0x48] sm:$0xff] %vm348, %v293
  %359 = vst.msk [vmem:[%s3 + $0x50] sm:$0xff] %vm348, %v294
  %360 = vst.msk [vmem:[%s3 + $0x58] sm:$0xff] %vm348, %v295
  %361 = vst.msk [vmem:[%s3 + $0x60] sm:$0xff] %vm348, %v296
  %362 = vst.msk [vmem:[%s3 + $0x68] sm:$0xff] %vm348, %v297
  %363 = vst.msk [vmem:[%s3 + $0x70] sm:$0xff] %vm348, %v298
  %364 = vst.msk [vmem:[%s3 + $0x78] sm:$0xff] %vm348, %v299
  %365 = vst.msk [vmem:[%s3 + $0x80] sm:$0xff] %vm348, %v300
  %366 = vst.msk [vmem:[%s3 + $0x88] sm:$0xff] %vm348, %v301
  %367 = vst.msk [vmem:[%s3 + $0x90] sm:$0xff] %vm348, %v302
  %368 = vst.msk [vmem:[%s3 + $0x98] sm:$0xff] %vm348, %v303
  %369 = vst.msk [vmem:[%s3 + $0xa0] sm:$0xff] %vm348, %v304
  %370 = vst.msk [vmem:[%s3 + $0xa8] sm:$0xff] %vm348, %v305
  %371 = vst.msk [vmem:[%s3 + $0xb0] sm:$0xff] %vm348, %v306
  %372 = vst.msk [vmem:[%s3 + $0xb8] sm:$0xff] %vm348, %v307
  %373 = vst.msk [vmem:[%s3 + $0xc0] sm:$0xff] %vm348, %v308
  %374 = vst.msk [vmem:[%s3 + $0xc8] sm:$0xff] %vm348, %v309
  %375 = vst.msk [vmem:[%s3 + $0xd0] sm:$0xff] %vm348, %v310
  %376 = vst.msk [vmem:[%s3 + $0xd8] sm:$0xff] %vm348, %v311
  %377 = vst.msk [vmem:[%s3 + $0xe0] sm:$0xff] %vm348, %v312
  %378 = vst.msk [vmem:[%s3 + $0xe8] sm:$0xff] %vm348, %v313
  %379 = vst.msk [vmem:[%s3 + $0xf0] sm:$0xff] %vm348, %v314
  %380 = vst.msk [vmem:[%s3 + $0xf8] sm:$0xff] %vm348, %v315
  %381 = vst.msk [vmem:[%s3 + $0x100] sm:$0xff] %vm348, %v316
  %382 = vst.msk [vmem:[%s3 + $0x108] sm:$0xff] %vm348, %v317
  %383 = vst.msk [vmem:[%s3 + $0x110] sm:$0xff] %vm348, %v318
  %384 = vst.msk [vmem:[%s3 + $0x118] sm:$0xff] %vm348, %v319
  %385 = vst.msk [vmem:[%s3 + $0x120] sm:$0xff] %vm348, %v320
  %386 = vst.msk [vmem:[%s3 + $0x128] sm:$0xff] %vm348, %v321
  %387 = vst.msk [vmem:[%s3 + $0x130] sm:$0xff] %vm348, %v322
  %388 = vst.msk [vmem:[%s3 + $0x138] sm:$0xff] %vm348, %v323
  %389 = vst.msk [vmem:[%s3 + $0x140] sm:$0xff] %vm348, %v324
  %390 = vst.msk [vmem:[%s3 + $0x148] sm:$0xff] %vm348, %v325
  %391 = vst.msk [vmem:[%s3 + $0x150] sm:$0xff] %vm348, %v326
  %392 = vst.msk [vmem:[%s3 + $0x158] sm:$0xff] %vm348, %v327
  %393 = vst.msk [vmem:[%s3 + $0x160] sm:$0xff] %vm348, %v328
  %394 = vst.msk [vmem:[%s3 + $0x168] sm:$0xff] %vm348, %v329
  %395 = vst.msk [vmem:[%s3 + $0x170] sm:$0xff] %vm348, %v330
  %396 = vst.msk [vmem:[%s3 + $0x178] sm:$0xff] %vm348, %v331
  %397 = vst.msk [vmem:[%s3 + $0x180] sm:$0xff] %vm348, %v332
  %398 = vst.msk [vmem:[%s3 + $0x188] sm:$0xff] %vm348, %v333
  %399 = vst.msk [vmem:[%s3 + $0x190] sm:$0xff] %vm348, %v334
  %400 = vst.msk [vmem:[%s3 + $0x198] sm:$0xff] %vm348, %v335
  %401 = vst.msk [vmem:[%s3 + $0x1a0] sm:$0xff] %vm348, %v336
  %402 = vst.msk [vmem:[%s3 + $0x1a8] sm:$0xff] %vm348, %v337
  %403 = vst.msk [vmem:[%s3 + $0x1b0] sm:$0xff] %vm348, %v338
  %404 = vst.msk [vmem:[%s3 + $0x1b8] sm:$0xff] %vm348, %v339
  %405 = vst.msk [vmem:[%s3 + $0x1c0] sm:$0xff] %vm348, %v340
  %406 = vst.msk [vmem:[%s3 + $0x1c8] sm:$0xff] %vm348, %v341
  %407 = vst.msk [vmem:[%s3 + $0x1d0] sm:$0xff] %vm348, %v342
  %408 = vst.msk [vmem:[%s3 + $0x1d8] sm:$0xff] %vm348, %v343
  %409 = vst.msk [vmem:[%s3 + $0x1e0] sm:$0xff] %vm348, %v344
  %410 = vst.msk [vmem:[%s3 + $0x1e8] sm:$0xff] %vm348, %v345
  %411 = vst.msk [vmem:[%s3 + $0x1f0] sm:$0xff] %vm348, %v346
  %412 = vst.msk [vmem:[%s3 + $0x1f8] sm:$0xff] %vm348, %v347
  // Predicated region
  $region14: #{pcbactiv_forward.3} parent=0 // pred_check
    _
  $region15: #{pcbactiv_forward.3} parent=0 // pred_check_branch
    %414 = sbr.rel (0) target = $region17
  $region16: #{pcbactiv_forward.3} parent=0 // pred_region
    _
  $region17: #{pcbactiv_forward.3} parent=0 // pred_fallthru
    _
  // Predicated region
  $region18: #{pcbactiv_forward.3} parent=0 // pred_check
    _
  $region19: #{pcbactiv_forward.3} parent=0 // pred_check_branch
    %416 = sbr.rel (0) target = $region21
  $region20: #{pcbactiv_forward.3} parent=0 // pred_region
    _
  $region21: #{pcbactiv_forward.3} parent=0 // pred_fallthru
    _

// kernel: pcbactiv_forward.2
$region0: #{pcbactiv_forward.2}
  #allocation0 [shape = 'u32[]', space=smem, size = 0x4, offset = 0x4, fixed_abs, tag = 'smem constant byte address 0x4 - core index']
  #allocation1 [shape = 'u32[144,128]{1,0:T(1,128)}', space=vmem, size = 0x12000, scoped, tag = 'internal scratch']
  %s0 = inlined_call_operand.vmem [shape: bf16[512,36], index: 0, kind: input, shape index: {}]
  %s1 = inlined_call_operand.vmem [shape: bf16[512,9], index: 1, kind: input, shape index: {}]
  %s2 = inlined_call_operand.vmem [shape: bf16[36,8], index: 2, kind: input, shape index: {}]
  %s3 = inlined_call_operand.vmem [shape: bf16[512,8], index: 3, kind: output, shape index: {0}]
  %s4 = inlined_call_operand.vmem [shape: f32[8,8], index: 4, kind: output, shape index: {1}]
  %5 = xla_tuple %s3, %s4
  %s6 = sld [smem:[#allocation0]]
  $region30: #{pcbactiv_forward.2} parent=0
    _
  %s8 = ssub.s32 1, %s6
  %s9 = scalar_select 0, %s8, %s6
  // Predicated region
  $region2: #{pcbactiv_forward.2} parent=0 // pred_check
    _
  $region3: #{pcbactiv_forward.2} parent=0 // pred_check_branch
    %11 = sbr.rel (0) target = $region5
  $region4: #{pcbactiv_forward.2} parent=0 // pred_region
    _
  $region5: #{pcbactiv_forward.2} parent=0 // pred_fallthru
    _
  // Predicated region
  $region6: #{pcbactiv_forward.2} parent=0 // pred_check
    _
  $region7: #{pcbactiv_forward.2} parent=0 // pred_check_branch
    %13 = sbr.rel (0) target = $region9
  $region8: #{pcbactiv_forward.2} parent=0 // pred_region
    _
  $region9: #{pcbactiv_forward.2} parent=0 // pred_fallthru
    _
  // Predicated region
  $region10: #{pcbactiv_forward.2} parent=0 // pred_check
    _
  $region11: #{pcbactiv_forward.2} parent=0 // pred_check_branch
    %15 = sbr.rel (0) target = $region13
  $region12: #{pcbactiv_forward.2} parent=0 // pred_region
    _
  $region13: #{pcbactiv_forward.2} parent=0 // pred_fallthru
    _
  %v17 = vld [vmem:[%s0] sm:$0xf]
  %v18 = vld [vmem:[%s0 + $0x4] sm:$0xf]
  %v19 = vld [vmem:[%s0 + $0x8] sm:$0xf]
  %v20 = vld [vmem:[%s0 + $0xc] sm:$0xf]
  %v21 = vld [vmem:[%s0 + $0x10] sm:$0xf]
  %v22 = vld [vmem:[%s0 + $0x14] sm:$0xf]
  %v23 = vld [vmem:[%s0 + $0x18] sm:$0xf]
  %v24 = vld [vmem:[%s0 + $0x1c] sm:$0xf]
  %v25 = vld [vmem:[%s0 + $0x20] sm:$0xf]
  %v26 = vld [vmem:[%s0 + $0x24] sm:$0xf]
  %v27 = vld [vmem:[%s0 + $0x28] sm:$0xf]
  %v28 = vld [vmem:[%s0 + $0x2c] sm:$0xf]
  %v29 = vld [vmem:[%s0 + $0x30] sm:$0xf]
  %v30 = vld [vmem:[%s0 + $0x34] sm:$0xf]
  %v31 = vld [vmem:[%s0 + $0x38] sm:$0xf]
  %v32 = vld [vmem:[%s0 + $0x3c] sm:$0xf]
  %v33 = vld [vmem:[%s0 + $0x40] sm:$0xf]
  %v34 = vld [vmem:[%s0 + $0x44] sm:$0xf]
  %v35 = vld [vmem:[%s0 + $0x48] sm:$0xf]
  %v36 = vld [vmem:[%s0 + $0x4c] sm:$0xf]
  %v37 = vld [vmem:[%s0 + $0x50] sm:$0xf]
  %v38 = vld [vmem:[%s0 + $0x54] sm:$0xf]
  %v39 = vld [vmem:[%s0 + $0x58] sm:$0xf]
  %v40 = vld [vmem:[%s0 + $0x5c] sm:$0xf]
  %v41 = vld [vmem:[%s0 + $0x60] sm:$0xf]
  %v42 = vld [vmem:[%s0 + $0x64] sm:$0xf]
  %v43 = vld [vmem:[%s0 + $0x68] sm:$0xf]
  %v44 = vld [vmem:[%s0 + $0x6c] sm:$0xf]
  %v45 = vld [vmem:[%s0 + $0x70] sm:$0xf]
  %v46 = vld [vmem:[%s0 + $0x74] sm:$0xf]
  %v47 = vld [vmem:[%s0 + $0x78] sm:$0xf]
  %v48 = vld [vmem:[%s0 + $0x7c] sm:$0xf]
  %v49 = vld [vmem:[%s0 + $0x80] sm:$0xf]
  %v50 = vld [vmem:[%s0 + $0x84] sm:$0xf]
  %v51 = vld [vmem:[%s0 + $0x88] sm:$0xf]
  %v52 = vld [vmem:[%s0 + $0x8c] sm:$0xf]
  %v53 = vld [vmem:[%s0 + $0x90] sm:$0xf]
  %v54 = vld [vmem:[%s0 + $0x94] sm:$0xf]
  %v55 = vld [vmem:[%s0 + $0x98] sm:$0xf]
  %v56 = vld [vmem:[%s0 + $0x9c] sm:$0xf]
  %v57 = vld [vmem:[%s0 + $0xa0] sm:$0xf]
  %v58 = vld [vmem:[%s0 + $0xa4] sm:$0xf]
  %v59 = vld [vmem:[%s0 + $0xa8] sm:$0xf]
  %v60 = vld [vmem:[%s0 + $0xac] sm:$0xf]
  %v61 = vld [vmem:[%s0 + $0xb0] sm:$0xf]
  %v62 = vld [vmem:[%s0 + $0xb4] sm:$0xf]
  %v63 = vld [vmem:[%s0 + $0xb8] sm:$0xf]
  %v64 = vld [vmem:[%s0 + $0xbc] sm:$0xf]
  %v65 = vld [vmem:[%s0 + $0xc0] sm:$0xf]
  %v66 = vld [vmem:[%s0 + $0xc4] sm:$0xf]
  %v67 = vld [vmem:[%s0 + $0xc8] sm:$0xf]
  %v68 = vld [vmem:[%s0 + $0xcc] sm:$0xf]
  %v69 = vld [vmem:[%s0 + $0xd0] sm:$0xf]
  %v70 = vld [vmem:[%s0 + $0xd4] sm:$0xf]
  %v71 = vld [vmem:[%s0 + $0xd8] sm:$0xf]
  %v72 = vld [vmem:[%s0 + $0xdc] sm:$0xf]
  %v73 = vld [vmem:[%s0 + $0xe0] sm:$0xf]
  %v74 = vld [vmem:[%s0 + $0xe4] sm:$0xf]
  %v75 = vld [vmem:[%s0 + $0xe8] sm:$0xf]
  %v76 = vld [vmem:[%s0 + $0xec] sm:$0xf]
  %v77 = vld [vmem:[%s0 + $0xf0] sm:$0xf]
  %v78 = vld [vmem:[%s0 + $0xf4] sm:$0xf]
  %v79 = vld [vmem:[%s0 + $0xf8] sm:$0xf]
  %v80 = vld [vmem:[%s0 + $0xfc] sm:$0xf]
  %v81 = vld [vmem:[%s2] sm:$0xf]
  %v82 = vld [vmem:[%s2 + $0x4] sm:$0xf]
  %v83 = vld [vmem:[%s2 + $0x8] sm:$0xf]
  %v84 = vld [vmem:[%s2 + $0xc] sm:$0xf]
  %v85 = vld [vmem:[%s2 + $0x10] sm:$0x3]
  %v150 = vunpack.c.l.b16 %v17
  %v151 = vunpack.c.l.b16 %v18
  %v152 = vunpack.c.l.b16 %v19
  %v153 = vunpack.c.l.b16 %v20
  %v154 = vunpack.c.l.b16 %v21
  %v155 = vunpack.c.l.b16 %v22
  %v156 = vunpack.c.l.b16 %v23
  %v157 = vunpack.c.l.b16 %v24
  %v158 = vunpack.c.l.b16 %v25
  %v159 = vunpack.c.l.b16 %v26
  %v160 = vunpack.c.l.b16 %v27
  %v161 = vunpack.c.l.b16 %v28
  %v162 = vunpack.c.l.b16 %v29
  %v163 = vunpack.c.l.b16 %v30
  %v164 = vunpack.c.l.b16 %v31
  %v165 = vunpack.c.l.b16 %v32
  %v166 = vunpack.c.l.b16 %v33
  %v167 = vunpack.c.l.b16 %v34
  %v168 = vunpack.c.l.b16 %v35
  %v169 = vunpack.c.l.b16 %v36
  %v170 = vunpack.c.l.b16 %v37
  %v171 = vunpack.c.l.b16 %v38
  %v172 = vunpack.c.l.b16 %v39
  %v173 = vunpack.c.l.b16 %v40
  %v174 = vunpack.c.l.b16 %v41
  %v175 = vunpack.c.l.b16 %v42
  %v176 = vunpack.c.l.b16 %v43
  %v177 = vunpack.c.l.b16 %v44
  %v178 = vunpack.c.l.b16 %v45
  %v179 = vunpack.c.l.b16 %v46
  %v180 = vunpack.c.l.b16 %v47
  %v181 = vunpack.c.l.b16 %v48
  %v182 = vunpack.c.l.b16 %v49
  %v183 = vunpack.c.l.b16 %v50
  %v184 = vunpack.c.l.b16 %v51
  %v185 = vunpack.c.l.b16 %v52
  %v186 = vunpack.c.l.b16 %v53
  %v187 = vunpack.c.l.b16 %v54
  %v188 = vunpack.c.l.b16 %v55
  %v189 = vunpack.c.l.b16 %v56
  %v190 = vunpack.c.l.b16 %v57
  %v191 = vunpack.c.l.b16 %v58
  %v192 = vunpack.c.l.b16 %v59
  %v193 = vunpack.c.l.b16 %v60
  %v194 = vunpack.c.l.b16 %v61
  %v195 = vunpack.c.l.b16 %v62
  %v196 = vunpack.c.l.b16 %v63
  %v197 = vunpack.c.l.b16 %v64
  %v198 = vunpack.c.l.b16 %v65
  %v199 = vunpack.c.l.b16 %v66
  %v200 = vunpack.c.l.b16 %v67
  %v201 = vunpack.c.l.b16 %v68
  %v202 = vunpack.c.l.b16 %v69
  %v203 = vunpack.c.l.b16 %v70
  %v204 = vunpack.c.l.b16 %v71
  %v205 = vunpack.c.l.b16 %v72
  %v206 = vunpack.c.l.b16 %v73
  %v207 = vunpack.c.l.b16 %v74
  %v208 = vunpack.c.l.b16 %v75
  %v209 = vunpack.c.l.b16 %v76
  %v210 = vunpack.c.l.b16 %v77
  %v211 = vunpack.c.l.b16 %v78
  %v212 = vunpack.c.l.b16 %v79
  %v213 = vunpack.c.l.b16 %v80
  %v214 = vpack.c.b16 %v151, %v150
  %v215 = vpack.c.b16 %v153, %v152
  %v216 = vpack.c.b16 %v155, %v154
  %v217 = vpack.c.b16 %v157, %v156
  %v218 = vpack.c.b16 %v159, %v158
  %v219 = vpack.c.b16 %v161, %v160
  %v220 = vpack.c.b16 %v163, %v162
  %v221 = vpack.c.b16 %v165, %v164
  %v222 = vpack.c.b16 %v167, %v166
  %v223 = vpack.c.b16 %v169, %v168
  %v224 = vpack.c.b16 %v171, %v170
  %v225 = vpack.c.b16 %v173, %v172
  %v226 = vpack.c.b16 %v175, %v174
  %v227 = vpack.c.b16 %v177, %v176
  %v228 = vpack.c.b16 %v179, %v178
  %v229 = vpack.c.b16 %v181, %v180
  %v230 = vpack.c.b16 %v183, %v182
  %v231 = vpack.c.b16 %v185, %v184
  %v232 = vpack.c.b16 %v187, %v186
  %v233 = vpack.c.b16 %v189, %v188
  %v234 = vpack.c.b16 %v191, %v190
  %v235 = vpack.c.b16 %v193, %v192
  %v236 = vpack.c.b16 %v195, %v194
  %v237 = vpack.c.b16 %v197, %v196
  %v238 = vpack.c.b16 %v199, %v198
  %v239 = vpack.c.b16 %v201, %v200
  %v240 = vpack.c.b16 %v203, %v202
  %v241 = vpack.c.b16 %v205, %v204
  %v242 = vpack.c.b16 %v207, %v206
  %v243 = vpack.c.b16 %v209, %v208
  %v244 = vpack.c.b16 %v211, %v210
  %v245 = vpack.c.b16 %v213, %v212
  %v251 = vunpack.c.l.b16 %v81
  %v252 = vunpack.c.l.b16 %v82
  %v253 = vunpack.c.l.b16 %v83
  %v254 = vunpack.c.l.b16 %v84
  %v255 = vunpack.c.l.b16 %v85
  %v256 = vpack.c.b16 %v252, %v251
  %v257 = vpack.c.b16 %v254, %v253
  %v258 = vpack.c.b16 %v255, %v255
  %vm261 = vcmask 293888
  %v263 = vsel %vm261, %v214, 0
  %v266 = vsel %vm261, %v215, 0
  %v269 = vsel %vm261, %v216, 0
  %v272 = vsel %vm261, %v217, 0
  %v275 = vsel %vm261, %v218, 0
  %v278 = vsel %vm261, %v219, 0
  %v281 = vsel %vm261, %v220, 0
  %v284 = vsel %vm261, %v221, 0
  %v287 = vsel %vm261, %v222, 0
  %v290 = vsel %vm261, %v223, 0
  %v293 = vsel %vm261, %v224, 0
  %v296 = vsel %vm261, %v225, 0
  %v299 = vsel %vm261, %v226, 0
  %v302 = vsel %vm261, %v227, 0
  %v305 = vsel %vm261, %v228, 0
  %v308 = vsel %vm261, %v229, 0
  %v311 = vsel %vm261, %v230, 0
  %v314 = vsel %vm261, %v231, 0
  %v317 = vsel %vm261, %v232, 0
  %v320 = vsel %vm261, %v233, 0
  %v323 = vsel %vm261, %v234, 0
  %v326 = vsel %vm261, %v235, 0
  %v329 = vsel %vm261, %v236, 0
  %v332 = vsel %vm261, %v237, 0
  %v335 = vsel %vm261, %v238, 0
  %v338 = vsel %vm261, %v239, 0
  %v341 = vsel %vm261, %v240, 0
  %v344 = vsel %vm261, %v241, 0
  %v347 = vsel %vm261, %v242, 0
  %v350 = vsel %vm261, %v243, 0
  %v353 = vsel %vm261, %v244, 0
  %v356 = vsel %vm261, %v245, 0
  %vm358 = vcmask 1041408
  %v360 = vsel %vm358, %v258, 0
  %362 = vmatprep.subr.bf16.mxu0 0
  %363 = vmatpush1.bf16.msra.mxu0 %v256
  %364 = vmatprep.subr.bf16.mxu0 0
  %365 = vmatpush1.bf16.msra.mxu0 %v257
  %366 = vmatprep.subr.bf16.mxu0 0
  %367 = vmatpush1.bf16.msra.mxu0 %v360
  %368 = vmatprep.subr.bf16.mxu0 0
  %369 = vmatpush1.bf16.msra.mxu0 0
  %370 = vmatprep.subr.bf16.mxu0 0
  %371 = vmatpush1.bf16.msra.mxu0 0
  %372 = vmatprep.subr.bf16.mxu0 0
  %373 = vmatpush1.bf16.msra.mxu0 0
  %374 = vmatprep.subr.bf16.mxu0 0
  %375 = vmatpush1.bf16.msra.mxu0 0
  %376 = vmatprep.subr.bf16.mxu0 0
  %377 = vmatpush1.bf16.msra.mxu0 0
  %378 = vmatprep.subr.bf16.mxu0 0
  %379 = vmatpush1.bf16.msra.mxu0 0
  %380 = vmatprep.subr.bf16.mxu0 0
  %381 = vmatpush1.bf16.msra.mxu0 0
  %382 = vmatprep.subr.bf16.mxu0 0
  %383 = vmatpush1.bf16.msra.mxu0 0
  %384 = vmatprep.subr.bf16.mxu0 0
  %385 = vmatpush1.bf16.msra.mxu0 0
  %386 = vmatprep.subr.bf16.mxu0 0
  %387 = vmatpush1.bf16.msra.mxu0 0
  %388 = vmatprep.subr.bf16.mxu0 0
  %389 = vmatpush1.bf16.msra.mxu0 0
  %390 = vmatprep.subr.bf16.mxu0 0
  %391 = vmatpush1.bf16.msra.mxu0 0
  %392 = vmatprep.subr.bf16.mxu0 0
  %393 = vmatpush1.bf16.msra.mxu0 0
  %394 = vmatprep.mubr.bf16.mxu0 0
  %395 = vmatmul.mubr.bf16.gmra.mrb[0].mxu0 %v263
  %v396 = vpop.f32.mrb[0].mxu0
  %v397 = vadd.f32 0.0, %v396
  %v398 = vpop.f32.mrb[0].mxu0
  %v399 = vpop.f32.mrb[0].mxu0
  %v400 = vadd.f32 0.0, %v399
  %v401 = vpop.f32.mrb[0].mxu0
  %402 = vmatprep.mubr.bf16.mxu0 0
  %403 = vmatmul.mubr.bf16.gmra.mrb[0].mxu0 %v266
  %v404 = vpop.f32.mrb[0].mxu0
  %v405 = vadd.f32 0.0, %v404
  %v406 = vpop.f32.mrb[0].mxu0
  %v407 = vpop.f32.mrb[0].mxu0
  %v408 = vadd.f32 0.0, %v407
  %v409 = vpop.f32.mrb[0].mxu0
  %410 = vmatprep.mubr.bf16.mxu0 0
  %411 = vmatmul.mubr.bf16.gmra.mrb[0].mxu0 %v269
  %v412 = vpop.f32.mrb[0].mxu0
  %v413 = vadd.f32 0.0, %v412
  %v414 = vpop.f32.mrb[0].mxu0
  %v415 = vpop.f32.mrb[0].mxu0
  %v416 = vadd.f32 0.0, %v415
  %v417 = vpop.f32.mrb[0].mxu0
  %418 = vmatprep.mubr.bf16.mxu0 0
  %419 = vmatmul.mubr.bf16.gmra.mrb[0].mxu0 %v272
  %v420 = vpop.f32.mrb[0].mxu0
  %v421 = vadd.f32 0.0, %v420
  %v422 = vpop.f32.mrb[0].mxu0
  %v423 = vpop.f32.mrb[0].mxu0
  %v424 = vadd.f32 0.0, %v423
  %v425 = vpop.f32.mrb[0].mxu0
  %426 = vmatprep.mubr.bf16.mxu0 0
  %427 = vmatmul.mubr.bf16.gmra.mrb[0].mxu0 %v275
  %v428 = vpop.f32.mrb[0].mxu0
  %v429 = vadd.f32 0.0, %v428
  %v430 = vpop.f32.mrb[0].mxu0
  %v431 = vpop.f32.mrb[0].mxu0
  %v432 = vadd.f32 0.0, %v431
  %v433 = vpop.f32.mrb[0].mxu0
  %434 = vmatprep.mubr.bf16.mxu0 0
  %435 = vmatmul.mubr.bf16.gmra.mrb[0].mxu0 %v278
  %v436 = vpop.f32.mrb[0].mxu0
  %v437 = vadd.f32 0.0, %v436
  %v438 = vpop.f32.mrb[0].mxu0
  %v439 = vpop.f32.mrb[0].mxu0
  %v440 = vadd.f32 0.0, %v439
  %v441 = vpop.f32.mrb[0].mxu0
  %442 = vmatprep.mubr.bf16.mxu0 0
  %443 = vmatmul.mubr.bf16.gmra.mrb[0].mxu0 %v281
  %v444 = vpop.f32.mrb[0].mxu0
  %v445 = vadd.f32 0.0, %v444
  %v446 = vpop.f32.mrb[0].mxu0
  %v447 = vpop.f32.mrb[0].mxu0
  %v448 = vadd.f32 0.0, %v447
  %v449 = vpop.f32.mrb[0].mxu0
  %450 = vmatprep.mubr.bf16.mxu0 0
  %451 = vmatmul.mubr.bf16.gmra.mrb[0].mxu0 %v284
  %v452 = vpop.f32.mrb[0].mxu0
  %v453 = vadd.f32 0.0, %v452
  %v454 = vpop.f32.mrb[0].mxu0
  %v455 = vpop.f32.mrb[0].mxu0
  %v456 = vadd.f32 0.0, %v455
  %v457 = vpop.f32.mrb[0].mxu0
  %458 = vmatprep.mubr.bf16.mxu0 0
  %459 = vmatmul.mubr.bf16.gmra.mrb[0].mxu0 %v287
  %v460 = vpop.f32.mrb[0].mxu0
  %v461 = vadd.f32 0.0, %v460
  %v462 = vpop.f32.mrb[0].mxu0
  %v463 = vpop.f32.mrb[0].mxu0
  %v464 = vadd.f32 0.0, %v463
  %v465 = vpop.f32.mrb[0].mxu0
  %466 = vmatprep.mubr.bf16.mxu0 0
  %467 = vmatmul.mubr.bf16.gmra.mrb[0].mxu0 %v290
  %v468 = vpop.f32.mrb[0].mxu0
  %v469 = vadd.f32 0.0, %v468
  %v470 = vpop.f32.mrb[0].mxu0
  %v471 = vpop.f32.mrb[0].mxu0
  %v472 = vadd.f32 0.0, %v471
  %v473 = vpop.f32.mrb[0].mxu0
  %474 = vmatprep.mubr.bf16.mxu0 0
  %475 = vmatmul.mubr.bf16.gmra.mrb[0].mxu0 %v293
  %v476 = vpop.f32.mrb[0].mxu0
  %v477 = vadd.f32 0.0, %v476
  %v478 = vpop.f32.mrb[0].mxu0
  %v479 = vpop.f32.mrb[0].mxu0
  %v480 = vadd.f32 0.0, %v479
  %v481 = vpop.f32.mrb[0].mxu0
  %482 = vmatprep.mubr.bf16.mxu0 0
  %483 = vmatmul.mubr.bf16.gmra.mrb[0].mxu0 %v296
  %v484 = vpop.f32.mrb[0].mxu0
  %v485 = vadd.f32 0.0, %v484
  %v486 = vpop.f32.mrb[0].mxu0
  %v487 = vpop.f32.mrb[0].mxu0
  %v488 = vadd.f32 0.0, %v487
  %v489 = vpop.f32.mrb[0].mxu0
  %490 = vmatprep.mubr.bf16.mxu0 0
  %491 = vmatmul.mubr.bf16.gmra.mrb[0].mxu0 %v299
  %v492 = vpop.f32.mrb[0].mxu0
  %v493 = vadd.f32 0.0, %v492
  %v494 = vpop.f32.mrb[0].mxu0
  %v495 = vpop.f32.mrb[0].mxu0
  %v496 = vadd.f32 0.0, %v495
  %v497 = vpop.f32.mrb[0].mxu0
  %498 = vmatprep.mubr.bf16.mxu0 0
  %499 = vmatmul.mubr.bf16.gmra.mrb[0].mxu0 %v302
  %v500 = vpop.f32.mrb[0].mxu0
  %v501 = vadd.f32 0.0, %v500
  %v502 = vpop.f32.mrb[0].mxu0
  %v503 = vpop.f32.mrb[0].mxu0
  %v504 = vadd.f32 0.0, %v503
  %v505 = vpop.f32.mrb[0].mxu0
  %506 = vmatprep.mubr.bf16.mxu0 0
  %507 = vmatmul.mubr.bf16.gmra.mrb[0].mxu0 %v305
  %v508 = vpop.f32.mrb[0].mxu0
  %v509 = vadd.f32 0.0, %v508
  %v510 = vpop.f32.mrb[0].mxu0
  %v511 = vpop.f32.mrb[0].mxu0
  %v512 = vadd.f32 0.0, %v511
  %v513 = vpop.f32.mrb[0].mxu0
  %514 = vmatprep.mubr.bf16.mxu0 0
  %515 = vmatmul.mubr.bf16.gmra.mrb[0].mxu0 %v308
  %v516 = vpop.f32.mrb[0].mxu0
  %v517 = vadd.f32 0.0, %v516
  %v518 = vpop.f32.mrb[0].mxu0
  %v519 = vpop.f32.mrb[0].mxu0
  %v520 = vadd.f32 0.0, %v519
  %v521 = vpop.f32.mrb[0].mxu0
  %522 = vmatprep.mubr.bf16.mxu0 0
  %523 = vmatmul.mubr.bf16.gmra.mrb[0].mxu0 %v311
  %v524 = vpop.f32.mrb[0].mxu0
  %v525 = vadd.f32 0.0, %v524
  %v526 = vpop.f32.mrb[0].mxu0
  %v527 = vpop.f32.mrb[0].mxu0
  %v528 = vadd.f32 0.0, %v527
  %v529 = vpop.f32.mrb[0].mxu0
  %530 = vmatprep.mubr.bf16.mxu0 0
  %531 = vmatmul.mubr.bf16.gmra.mrb[0].mxu0 %v314
  %v532 = vpop.f32.mrb[0].mxu0
  %v533 = vadd.f32 0.0, %v532
  %v534 = vpop.f32.mrb[0].mxu0
  %v535 = vpop.f32.mrb[0].mxu0
  %v536 = vadd.f32 0.0, %v535
  %v537 = vpop.f32.mrb[0].mxu0
  %538 = vmatprep.mubr.bf16.mxu0 0
  %539 = vmatmul.mubr.bf16.gmra.mrb[0].mxu0 %v317
  %v540 = vpop.f32.mrb[0].mxu0
  %v541 = vadd.f32 0.0, %v540
  %v542 = vpop.f32.mrb[0].mxu0
  %v543 = vpop.f32.mrb[0].mxu0
  %v544 = vadd.f32 0.0, %v543
  %v545 = vpop.f32.mrb[0].mxu0
  %546 = vmatprep.mubr.bf16.mxu0 0
  %547 = vmatmul.mubr.bf16.gmra.mrb[0].mxu0 %v320
  %v548 = vpop.f32.mrb[0].mxu0
  %v549 = vadd.f32 0.0, %v548
  %v550 = vpop.f32.mrb[0].mxu0
  %v551 = vpop.f32.mrb[0].mxu0
  %v552 = vadd.f32 0.0, %v551
  %v553 = vpop.f32.mrb[0].mxu0
  %554 = vmatprep.mubr.bf16.mxu0 0
  %555 = vmatmul.mubr.bf16.gmra.mrb[0].mxu0 %v323
  %v556 = vpop.f32.mrb[0].mxu0
  %v557 = vadd.f32 0.0, %v556
  %v558 = vpop.f32.mrb[0].mxu0
  %v559 = vpop.f32.mrb[0].mxu0
  %v560 = vadd.f32 0.0, %v559
  %v561 = vpop.f32.mrb[0].mxu0
  %562 = vmatprep.mubr.bf16.mxu0 0
  %563 = vmatmul.mubr.bf16.gmra.mrb[0].mxu0 %v326
  %v564 = vpop.f32.mrb[0].mxu0
  %v565 = vadd.f32 0.0, %v564
  %v566 = vpop.f32.mrb[0].mxu0
  %v567 = vpop.f32.mrb[0].mxu0
  %v568 = vadd.f32 0.0, %v567
  %v569 = vpop.f32.mrb[0].mxu0
  %570 = vmatprep.mubr.bf16.mxu0 0
  %571 = vmatmul.mubr.bf16.gmra.mrb[0].mxu0 %v329
  %v572 = vpop.f32.mrb[0].mxu0
  %v573 = vadd.f32 0.0, %v572
  %v574 = vpop.f32.mrb[0].mxu0
  %v575 = vpop.f32.mrb[0].mxu0
  %v576 = vadd.f32 0.0, %v575
  %v577 = vpop.f32.mrb[0].mxu0
  %578 = vmatprep.mubr.bf16.mxu0 0
  %579 = vmatmul.mubr.bf16.gmra.mrb[0].mxu0 %v332
  %v580 = vpop.f32.mrb[0].mxu0
  %v581 = vadd.f32 0.0, %v580
  %v582 = vpop.f32.mrb[0].mxu0
  %v583 = vpop.f32.mrb[0].mxu0
  %v584 = vadd.f32 0.0, %v583
  %v585 = vpop.f32.mrb[0].mxu0
  %586 = vmatprep.mubr.bf16.mxu0 0
  %587 = vmatmul.mubr.bf16.gmra.mrb[0].mxu0 %v335
  %v588 = vpop.f32.mrb[0].mxu0
  %v589 = vadd.f32 0.0, %v588
  %v590 = vpop.f32.mrb[0].mxu0
  %v591 = vpop.f32.mrb[0].mxu0
  %v592 = vadd.f32 0.0, %v591
  %v593 = vpop.f32.mrb[0].mxu0
  %594 = vmatprep.mubr.bf16.mxu0 0
  %595 = vmatmul.mubr.bf16.gmra.mrb[0].mxu0 %v338
  %v596 = vpop.f32.mrb[0].mxu0
  %v597 = vadd.f32 0.0, %v596
  %v598 = vpop.f32.mrb[0].mxu0
  %v599 = vpop.f32.mrb[0].mxu0
  %v600 = vadd.f32 0.0, %v599
  %v601 = vpop.f32.mrb[0].mxu0
  %602 = vmatprep.mubr.bf16.mxu0 0
  %603 = vmatmul.mubr.bf16.gmra.mrb[0].mxu0 %v341
  %v604 = vpop.f32.mrb[0].mxu0
  %v605 = vadd.f32 0.0, %v604
  %v606 = vpop.f32.mrb[0].mxu0
  %v607 = vpop.f32.mrb[0].mxu0
  %v608 = vadd.f32 0.0, %v607
  %v609 = vpop.f32.mrb[0].mxu0
  %610 = vmatprep.mubr.bf16.mxu0 0
  %611 = vmatmul.mubr.bf16.gmra.mrb[0].mxu0 %v344
  %v612 = vpop.f32.mrb[0].mxu0
  %v613 = vadd.f32 0.0, %v612
  %v614 = vpop.f32.mrb[0].mxu0
  %v615 = vpop.f32.mrb[0].mxu0
  %v616 = vadd.f32 0.0, %v615
  %v617 = vpop.f32.mrb[0].mxu0
  %618 = vmatprep.mubr.bf16.mxu0 0
  %619 = vmatmul.mubr.bf16.gmra.mrb[0].mxu0 %v347
  %v620 = vpop.f32.mrb[0].mxu0
  %v621 = vadd.f32 0.0, %v620
  %v622 = vpop.f32.mrb[0].mxu0
  %v623 = vpop.f32.mrb[0].mxu0
  %v624 = vadd.f32 0.0, %v623
  %v625 = vpop.f32.mrb[0].mxu0
  %626 = vmatprep.mubr.bf16.mxu0 0
  %627 = vmatmul.mubr.bf16.gmra.mrb[0].mxu0 %v350
  %v628 = vpop.f32.mrb[0].mxu0
  %v629 = vadd.f32 0.0, %v628
  %v630 = vpop.f32.mrb[0].mxu0
  %v631 = vpop.f32.mrb[0].mxu0
  %v632 = vadd.f32 0.0, %v631
  %v633 = vpop.f32.mrb[0].mxu0
  %634 = vmatprep.mubr.bf16.mxu0 0
  %635 = vmatmul.mubr.bf16.gmra.mrb[0].mxu0 %v353
  %v636 = vpop.f32.mrb[0].mxu0
  %v637 = vadd.f32 0.0, %v636
  %v638 = vpop.f32.mrb[0].mxu0
  %v639 = vpop.f32.mrb[0].mxu0
  %v640 = vadd.f32 0.0, %v639
  %v641 = vpop.f32.mrb[0].mxu0
  %642 = vmatprep.mubr.bf16.mxu0 0
  %643 = vmatmul.mubr.bf16.gmra.mrb[0].mxu0 %v356
  %v644 = vpop.f32.mrb[0].mxu0
  %v645 = vadd.f32 0.0, %v644
  %v646 = vpop.f32.mrb[0].mxu0
  %v647 = vpop.f32.mrb[0].mxu0
  %v648 = vadd.f32 0.0, %v647
  %v649 = vpop.f32.mrb[0].mxu0
  %650 = vdwg.mxu0
  %v651 = vld [vmem:[%s1] sm:$0xf]
  %v652 = vld [vmem:[%s1 + $0x4] sm:$0xf]
  %v653 = vld [vmem:[%s1 + $0x8] sm:$0xf]
  %v654 = vld [vmem:[%s1 + $0xc] sm:$0xf]
  %v655 = vld [vmem:[%s1 + $0x10] sm:$0xf]
  %v656 = vld [vmem:[%s1 + $0x14] sm:$0xf]
  %v657 = vld [vmem:[%s1 + $0x18] sm:$0xf]
  %v658 = vld [vmem:[%s1 + $0x1c] sm:$0xf]
  %v659 = vld [vmem:[%s1 + $0x20] sm:$0xf]
  %v660 = vld [vmem:[%s1 + $0x24] sm:$0xf]
  %v661 = vld [vmem:[%s1 + $0x28] sm:$0xf]
  %v662 = vld [vmem:[%s1 + $0x2c] sm:$0xf]
  %v663 = vld [vmem:[%s1 + $0x30] sm:$0xf]
  %v664 = vld [vmem:[%s1 + $0x34] sm:$0xf]
  %v665 = vld [vmem:[%s1 + $0x38] sm:$0xf]
  %v666 = vld [vmem:[%s1 + $0x3c] sm:$0xf]
  %v667 = vld [vmem:[%s1 + $0x40] sm:$0xf]
  %v668 = vld [vmem:[%s1 + $0x44] sm:$0xf]
  %v669 = vld [vmem:[%s1 + $0x48] sm:$0xf]
  %v670 = vld [vmem:[%s1 + $0x4c] sm:$0xf]
  %v671 = vld [vmem:[%s1 + $0x50] sm:$0xf]
  %v672 = vld [vmem:[%s1 + $0x54] sm:$0xf]
  %v673 = vld [vmem:[%s1 + $0x58] sm:$0xf]
  %v674 = vld [vmem:[%s1 + $0x5c] sm:$0xf]
  %v675 = vld [vmem:[%s1 + $0x60] sm:$0xf]
  %v676 = vld [vmem:[%s1 + $0x64] sm:$0xf]
  %v677 = vld [vmem:[%s1 + $0x68] sm:$0xf]
  %v678 = vld [vmem:[%s1 + $0x6c] sm:$0xf]
  %v679 = vld [vmem:[%s1 + $0x70] sm:$0xf]
  %v680 = vld [vmem:[%s1 + $0x74] sm:$0xf]
  %v681 = vld [vmem:[%s1 + $0x78] sm:$0xf]
  %v682 = vld [vmem:[%s1 + $0x7c] sm:$0xf]
  %v683 = vld [vmem:[%s1 + $0x80] sm:$0xf]
  %v684 = vld [vmem:[%s1 + $0x84] sm:$0xf]
  %v685 = vld [vmem:[%s1 + $0x88] sm:$0xf]
  %v686 = vld [vmem:[%s1 + $0x8c] sm:$0xf]
  %v687 = vld [vmem:[%s1 + $0x90] sm:$0xf]
  %v688 = vld [vmem:[%s1 + $0x94] sm:$0xf]
  %v689 = vld [vmem:[%s1 + $0x98] sm:$0xf]
  %v690 = vld [vmem:[%s1 + $0x9c] sm:$0xf]
  %v691 = vld [vmem:[%s1 + $0xa0] sm:$0xf]
  %v692 = vld [vmem:[%s1 + $0xa4] sm:$0xf]
  %v693 = vld [vmem:[%s1 + $0xa8] sm:$0xf]
  %v694 = vld [vmem:[%s1 + $0xac] sm:$0xf]
  %v695 = vld [vmem:[%s1 + $0xb0] sm:$0xf]
  %v696 = vld [vmem:[%s1 + $0xb4] sm:$0xf]
  %v697 = vld [vmem:[%s1 + $0xb8] sm:$0xf]
  %v698 = vld [vmem:[%s1 + $0xbc] sm:$0xf]
  %v699 = vld [vmem:[%s1 + $0xc0] sm:$0xf]
  %v700 = vld [vmem:[%s1 + $0xc4] sm:$0xf]
  %v701 = vld [vmem:[%s1 + $0xc8] sm:$0xf]
  %v702 = vld [vmem:[%s1 + $0xcc] sm:$0xf]
  %v703 = vld [vmem:[%s1 + $0xd0] sm:$0xf]
  %v704 = vld [vmem:[%s1 + $0xd4] sm:$0xf]
  %v705 = vld [vmem:[%s1 + $0xd8] sm:$0xf]
  %v706 = vld [vmem:[%s1 + $0xdc] sm:$0xf]
  %v707 = vld [vmem:[%s1 + $0xe0] sm:$0xf]
  %v708 = vld [vmem:[%s1 + $0xe4] sm:$0xf]
  %v709 = vld [vmem:[%s1 + $0xe8] sm:$0xf]
  %v710 = vld [vmem:[%s1 + $0xec] sm:$0xf]
  %v711 = vld [vmem:[%s1 + $0xf0] sm:$0xf]
  %v712 = vld [vmem:[%s1 + $0xf4] sm:$0xf]
  %v713 = vld [vmem:[%s1 + $0xf8] sm:$0xf]
  %v714 = vld [vmem:[%s1 + $0xfc] sm:$0xf]
  %v715 = vunpack.c.l.bf16 %v651
  %v716 = vunpack.c.l.bf16 %v652
  %v717 = vunpack.c.l.bf16 %v653
  %v718 = vunpack.c.l.bf16 %v654
  %v719 = vunpack.c.l.bf16 %v655
  %v720 = vunpack.c.l.bf16 %v656
  %v721 = vunpack.c.l.bf16 %v657
  %v722 = vunpack.c.l.bf16 %v658
  %v723 = vunpack.c.l.bf16 %v659
  %v724 = vunpack.c.l.bf16 %v660
  %v725 = vunpack.c.l.bf16 %v661
  %v726 = vunpack.c.l.bf16 %v662
  %v727 = vunpack.c.l.bf16 %v663
  %v728 = vunpack.c.l.bf16 %v664
  %v729 = vunpack.c.l.bf16 %v665
  %v730 = vunpack.c.l.bf16 %v666
  %v731 = vunpack.c.l.bf16 %v667
  %v732 = vunpack.c.l.bf16 %v668
  %v733 = vunpack.c.l.bf16 %v669
  %v734 = vunpack.c.l.bf16 %v670
  %v735 = vunpack.c.l.bf16 %v671
  %v736 = vunpack.c.l.bf16 %v672
  %v737 = vunpack.c.l.bf16 %v673
  %v738 = vunpack.c.l.bf16 %v674
  %v739 = vunpack.c.l.bf16 %v675
  %v740 = vunpack.c.l.bf16 %v676
  %v741 = vunpack.c.l.bf16 %v677
  %v742 = vunpack.c.l.bf16 %v678
  %v743 = vunpack.c.l.bf16 %v679
  %v744 = vunpack.c.l.bf16 %v680
  %v745 = vunpack.c.l.bf16 %v681
  %v746 = vunpack.c.l.bf16 %v682
  %v747 = vunpack.c.l.bf16 %v683
  %v748 = vunpack.c.l.bf16 %v684
  %v749 = vunpack.c.l.bf16 %v685
  %v750 = vunpack.c.l.bf16 %v686
  %v751 = vunpack.c.l.bf16 %v687
  %v752 = vunpack.c.l.bf16 %v688
  %v753 = vunpack.c.l.bf16 %v689
  %v754 = vunpack.c.l.bf16 %v690
  %v755 = vunpack.c.l.bf16 %v691
  %v756 = vunpack.c.l.bf16 %v692
  %v757 = vunpack.c.l.bf16 %v693
  %v758 = vunpack.c.l.bf16 %v694
  %v759 = vunpack.c.l.bf16 %v695
  %v760 = vunpack.c.l.bf16 %v696
  %v761 = vunpack.c.l.bf16 %v697
  %v762 = vunpack.c.l.bf16 %v698
  %v763 = vunpack.c.l.bf16 %v699
  %v764 = vunpack.c.l.bf16 %v700
  %v765 = vunpack.c.l.bf16 %v701
  %v766 = vunpack.c.l.bf16 %v702
  %v767 = vunpack.c.l.bf16 %v703
  %v768 = vunpack.c.l.bf16 %v704
  %v769 = vunpack.c.l.bf16 %v705
  %v770 = vunpack.c.l.bf16 %v706
  %v771 = vunpack.c.l.bf16 %v707
  %v772 = vunpack.c.l.bf16 %v708
  %v773 = vunpack.c.l.bf16 %v709
  %v774 = vunpack.c.l.bf16 %v710
  %v775 = vunpack.c.l.bf16 %v711
  %v776 = vunpack.c.l.bf16 %v712
  %v777 = vunpack.c.l.bf16 %v713
  %v778 = vunpack.c.l.bf16 %v714
  %vm779 = vcmask 72704
  %v780 = vsel %vm779, %v715, 0.0
  %781 = vadd.xlane.f32.xlu0 %v780
  %v782 = vpop.xlane.xlu0 %781
  %v783 = vsel %vm779, %v716, 0.0
  %784 = vadd.xlane.f32.xlu0 %v783
  %v785 = vpop.xlane.xlu0 %784
  %v786 = vsel %vm779, %v717, 0.0
  %787 = vadd.xlane.f32.xlu0 %v786
  %v788 = vpop.xlane.xlu0 %787
  %v789 = vsel %vm779, %v718, 0.0
  %790 = vadd.xlane.f32.xlu0 %v789
  %v791 = vpop.xlane.xlu0 %790
  %v792 = vsel %vm779, %v719, 0.0
  %793 = vadd.xlane.f32.xlu0 %v792
  %v794 = vpop.xlane.xlu0 %793
  %v795 = vsel %vm779, %v720, 0.0
  %796 = vadd.xlane.f32.xlu0 %v795
  %v797 = vpop.xlane.xlu0 %796
  %v798 = vsel %vm779, %v721, 0.0
  %799 = vadd.xlane.f32.xlu0 %v798
  %v800 = vpop.xlane.xlu0 %799
  %v801 = vsel %vm779, %v722, 0.0
  %802 = vadd.xlane.f32.xlu0 %v801
  %v803 = vpop.xlane.xlu0 %802
  %v804 = vsel %vm779, %v723, 0.0
  %805 = vadd.xlane.f32.xlu0 %v804
  %v806 = vpop.xlane.xlu0 %805
  %v807 = vsel %vm779, %v724, 0.0
  %808 = vadd.xlane.f32.xlu0 %v807
  %v809 = vpop.xlane.xlu0 %808
  %v810 = vsel %vm779, %v725, 0.0
  %811 = vadd.xlane.f32.xlu0 %v810
  %v812 = vpop.xlane.xlu0 %811
  %v813 = vsel %vm779, %v726, 0.0
  %814 = vadd.xlane.f32.xlu0 %v813
  %v815 = vpop.xlane.xlu0 %814
  %v816 = vsel %vm779, %v727, 0.0
  %817 = vadd.xlane.f32.xlu0 %v816
  %v818 = vpop.xlane.xlu0 %817
  %v819 = vsel %vm779, %v728, 0.0
  %820 = vadd.xlane.f32.xlu0 %v819
  %v821 = vpop.xlane.xlu0 %820
  %v822 = vsel %vm779, %v729, 0.0
  %823 = vadd.xlane.f32.xlu0 %v822
  %v824 = vpop.xlane.xlu0 %823
  %v825 = vsel %vm779, %v730, 0.0
  %826 = vadd.xlane.f32.xlu0 %v825
  %v827 = vpop.xlane.xlu0 %826
  %v828 = vsel %vm779, %v731, 0.0
  %829 = vadd.xlane.f32.xlu0 %v828
  %v830 = vpop.xlane.xlu0 %829
  %v831 = vsel %vm779, %v732, 0.0
  %832 = vadd.xlane.f32.xlu0 %v831
  %v833 = vpop.xlane.xlu0 %832
  %v834 = vsel %vm779, %v733, 0.0
  %835 = vadd.xlane.f32.xlu0 %v834
  %v836 = vpop.xlane.xlu0 %835
  %v837 = vsel %vm779, %v734, 0.0
  %838 = vadd.xlane.f32.xlu0 %v837
  %v839 = vpop.xlane.xlu0 %838
  %v840 = vsel %vm779, %v735, 0.0
  %841 = vadd.xlane.f32.xlu0 %v840
  %v842 = vpop.xlane.xlu0 %841
  %v843 = vsel %vm779, %v736, 0.0
  %844 = vadd.xlane.f32.xlu0 %v843
  %v845 = vpop.xlane.xlu0 %844
  %v846 = vsel %vm779, %v737, 0.0
  %847 = vadd.xlane.f32.xlu0 %v846
  %v848 = vpop.xlane.xlu0 %847
  %v849 = vsel %vm779, %v738, 0.0
  %850 = vadd.xlane.f32.xlu0 %v849
  %v851 = vpop.xlane.xlu0 %850
  %v852 = vsel %vm779, %v739, 0.0
  %853 = vadd.xlane.f32.xlu0 %v852
  %v854 = vpop.xlane.xlu0 %853
  %v855 = vsel %vm779, %v740, 0.0
  %856 = vadd.xlane.f32.xlu0 %v855
  %v857 = vpop.xlane.xlu0 %856
  %v858 = vsel %vm779, %v741, 0.0
  %859 = vadd.xlane.f32.xlu0 %v858
  %v860 = vpop.xlane.xlu0 %859
  %v861 = vsel %vm779, %v742, 0.0
  %862 = vadd.xlane.f32.xlu0 %v861
  %v863 = vpop.xlane.xlu0 %862
  %v864 = vsel %vm779, %v743, 0.0
  %865 = vadd.xlane.f32.xlu0 %v864
  %v866 = vpop.xlane.xlu0 %865
  %v867 = vsel %vm779, %v744, 0.0
  %868 = vadd.xlane.f32.xlu0 %v867
  %v869 = vpop.xlane.xlu0 %868
  %v870 = vsel %vm779, %v745, 0.0
  %871 = vadd.xlane.f32.xlu0 %v870
  %v872 = vpop.xlane.xlu0 %871
  %v873 = vsel %vm779, %v746, 0.0
  %874 = vadd.xlane.f32.xlu0 %v873
  %v875 = vpop.xlane.xlu0 %874
  %v876 = vsel %vm779, %v747, 0.0
  %877 = vadd.xlane.f32.xlu0 %v876
  %v878 = vpop.xlane.xlu0 %877
  %v879 = vsel %vm779, %v748, 0.0
  %880 = vadd.xlane.f32.xlu0 %v879
  %v881 = vpop.xlane.xlu0 %880
  %v882 = vsel %vm779, %v749, 0.0
  %883 = vadd.xlane.f32.xlu0 %v882
  %v884 = vpop.xlane.xlu0 %883
  %v885 = vsel %vm779, %v750, 0.0
  %886 = vadd.xlane.f32.xlu0 %v885
  %v887 = vpop.xlane.xlu0 %886
  %v888 = vsel %vm779, %v751, 0.0
  %889 = vadd.xlane.f32.xlu0 %v888
  %v890 = vpop.xlane.xlu0 %889
  %v891 = vsel %vm779, %v752, 0.0
  %892 = vadd.xlane.f32.xlu0 %v891
  %v893 = vpop.xlane.xlu0 %892
  %v894 = vsel %vm779, %v753, 0.0
  %895 = vadd.xlane.f32.xlu0 %v894
  %v896 = vpop.xlane.xlu0 %895
  %v897 = vsel %vm779, %v754, 0.0
  %898 = vadd.xlane.f32.xlu0 %v897
  %v899 = vpop.xlane.xlu0 %898
  %v900 = vsel %vm779, %v755, 0.0
  %901 = vadd.xlane.f32.xlu0 %v900
  %v902 = vpop.xlane.xlu0 %901
  %v903 = vsel %vm779, %v756, 0.0
  %904 = vadd.xlane.f32.xlu0 %v903
  %v905 = vpop.xlane.xlu0 %904
  %v906 = vsel %vm779, %v757, 0.0
  %907 = vadd.xlane.f32.xlu0 %v906
  %v908 = vpop.xlane.xlu0 %907
  %v909 = vsel %vm779, %v758, 0.0
  %910 = vadd.xlane.f32.xlu0 %v909
  %v911 = vpop.xlane.xlu0 %910
  %v912 = vsel %vm779, %v759, 0.0
  %913 = vadd.xlane.f32.xlu0 %v912
  %v914 = vpop.xlane.xlu0 %913
  %v915 = vsel %vm779, %v760, 0.0
  %916 = vadd.xlane.f32.xlu0 %v915
  %v917 = vpop.xlane.xlu0 %916
  %v918 = vsel %vm779, %v761, 0.0
  %919 = vadd.xlane.f32.xlu0 %v918
  %v920 = vpop.xlane.xlu0 %919
  %v921 = vsel %vm779, %v762, 0.0
  %922 = vadd.xlane.f32.xlu0 %v921
  %v923 = vpop.xlane.xlu0 %922
  %v924 = vsel %vm779, %v763, 0.0
  %925 = vadd.xlane.f32.xlu0 %v924
  %v926 = vpop.xlane.xlu0 %925
  %v927 = vsel %vm779, %v764, 0.0
  %928 = vadd.xlane.f32.xlu0 %v927
  %v929 = vpop.xlane.xlu0 %928
  %v930 = vsel %vm779, %v765, 0.0
  %931 = vadd.xlane.f32.xlu0 %v930
  %v932 = vpop.xlane.xlu0 %931
  %v933 = vsel %vm779, %v766, 0.0
  %934 = vadd.xlane.f32.xlu0 %v933
  %v935 = vpop.xlane.xlu0 %934
  %v936 = vsel %vm779, %v767, 0.0
  %937 = vadd.xlane.f32.xlu0 %v936
  %v938 = vpop.xlane.xlu0 %937
  %v939 = vsel %vm779, %v768, 0.0
  %940 = vadd.xlane.f32.xlu0 %v939
  %v941 = vpop.xlane.xlu0 %940
  %v942 = vsel %vm779, %v769, 0.0
  %943 = vadd.xlane.f32.xlu0 %v942
  %v944 = vpop.xlane.xlu0 %943
  %v945 = vsel %vm779, %v770, 0.0
  %946 = vadd.xlane.f32.xlu0 %v945
  %v947 = vpop.xlane.xlu0 %946
  %v948 = vsel %vm779, %v771, 0.0
  %949 = vadd.xlane.f32.xlu0 %v948
  %v950 = vpop.xlane.xlu0 %949
  %v951 = vsel %vm779, %v772, 0.0
  %952 = vadd.xlane.f32.xlu0 %v951
  %v953 = vpop.xlane.xlu0 %952
  %v954 = vsel %vm779, %v773, 0.0
  %955 = vadd.xlane.f32.xlu0 %v954
  %v956 = vpop.xlane.xlu0 %955
  %v957 = vsel %vm779, %v774, 0.0
  %958 = vadd.xlane.f32.xlu0 %v957
  %v959 = vpop.xlane.xlu0 %958
  %v960 = vsel %vm779, %v775, 0.0
  %961 = vadd.xlane.f32.xlu0 %v960
  %v962 = vpop.xlane.xlu0 %961
  %v963 = vsel %vm779, %v776, 0.0
  %964 = vadd.xlane.f32.xlu0 %v963
  %v965 = vpop.xlane.xlu0 %964
  %v966 = vsel %vm779, %v777, 0.0
  %967 = vadd.xlane.f32.xlu0 %v966
  %v968 = vpop.xlane.xlu0 %967
  %v969 = vsel %vm779, %v778, 0.0
  %970 = vadd.xlane.f32.xlu0 %v969
  %v971 = vpop.xlane.xlu0 %970
  %vm972 = vcmp.gt.f32.partialorder %v782, 0.0
  %vm973 = vcmp.gt.f32.partialorder %v785, 0.0
  %vm974 = vcmp.gt.f32.partialorder %v788, 0.0
  %vm975 = vcmp.gt.f32.partialorder %v791, 0.0
  %vm976 = vcmp.gt.f32.partialorder %v794, 0.0
  %vm977 = vcmp.gt.f32.partialorder %v797, 0.0
  %vm978 = vcmp.gt.f32.partialorder %v800, 0.0
  %vm979 = vcmp.gt.f32.partialorder %v803, 0.0
  %vm980 = vcmp.gt.f32.partialorder %v806, 0.0
  %vm981 = vcmp.gt.f32.partialorder %v809, 0.0
  %vm982 = vcmp.gt.f32.partialorder %v812, 0.0
  %vm983 = vcmp.gt.f32.partialorder %v815, 0.0
  %vm984 = vcmp.gt.f32.partialorder %v818, 0.0
  %vm985 = vcmp.gt.f32.partialorder %v821, 0.0
  %vm986 = vcmp.gt.f32.partialorder %v824, 0.0
  %vm987 = vcmp.gt.f32.partialorder %v827, 0.0
  %vm988 = vcmp.gt.f32.partialorder %v830, 0.0
  %vm989 = vcmp.gt.f32.partialorder %v833, 0.0
  %vm990 = vcmp.gt.f32.partialorder %v836, 0.0
  %vm991 = vcmp.gt.f32.partialorder %v839, 0.0
  %vm992 = vcmp.gt.f32.partialorder %v842, 0.0
  %vm993 = vcmp.gt.f32.partialorder %v845, 0.0
  %vm994 = vcmp.gt.f32.partialorder %v848, 0.0
  %vm995 = vcmp.gt.f32.partialorder %v851, 0.0
  %vm996 = vcmp.gt.f32.partialorder %v854, 0.0
  %vm997 = vcmp.gt.f32.partialorder %v857, 0.0
  %vm998 = vcmp.gt.f32.partialorder %v860, 0.0
  %vm999 = vcmp.gt.f32.partialorder %v863, 0.0
  %vm1000 = vcmp.gt.f32.partialorder %v866, 0.0
  %vm1001 = vcmp.gt.f32.partialorder %v869, 0.0
  %vm1002 = vcmp.gt.f32.partialorder %v872, 0.0
  %vm1003 = vcmp.gt.f32.partialorder %v875, 0.0
  %vm1004 = vcmp.gt.f32.partialorder %v878, 0.0
  %vm1005 = vcmp.gt.f32.partialorder %v881, 0.0
  %vm1006 = vcmp.gt.f32.partialorder %v884, 0.0
  %vm1007 = vcmp.gt.f32.partialorder %v887, 0.0
  %vm1008 = vcmp.gt.f32.partialorder %v890, 0.0
  %vm1009 = vcmp.gt.f32.partialorder %v893, 0.0
  %vm1010 = vcmp.gt.f32.partialorder %v896, 0.0
  %vm1011 = vcmp.gt.f32.partialorder %v899, 0.0
  %vm1012 = vcmp.gt.f32.partialorder %v902, 0.0
  %vm1013 = vcmp.gt.f32.partialorder %v905, 0.0
  %vm1014 = vcmp.gt.f32.partialorder %v908, 0.0
  %vm1015 = vcmp.gt.f32.partialorder %v911, 0.0
  %vm1016 = vcmp.gt.f32.partialorder %v914, 0.0
  %vm1017 = vcmp.gt.f32.partialorder %v917, 0.0
  %vm1018 = vcmp.gt.f32.partialorder %v920, 0.0
  %vm1019 = vcmp.gt.f32.partialorder %v923, 0.0
  %vm1020 = vcmp.gt.f32.partialorder %v926, 0.0
  %vm1021 = vcmp.gt.f32.partialorder %v929, 0.0
  %vm1022 = vcmp.gt.f32.partialorder %v932, 0.0
  %vm1023 = vcmp.gt.f32.partialorder %v935, 0.0
  %vm1024 = vcmp.gt.f32.partialorder %v938, 0.0
  %vm1025 = vcmp.gt.f32.partialorder %v941, 0.0
  %vm1026 = vcmp.gt.f32.partialorder %v944, 0.0
  %vm1027 = vcmp.gt.f32.partialorder %v947, 0.0
  %vm1028 = vcmp.gt.f32.partialorder %v950, 0.0
  %vm1029 = vcmp.gt.f32.partialorder %v953, 0.0
  %vm1030 = vcmp.gt.f32.partialorder %v956, 0.0
  %vm1031 = vcmp.gt.f32.partialorder %v959, 0.0
  %vm1032 = vcmp.gt.f32.partialorder %v962, 0.0
  %vm1033 = vcmp.gt.f32.partialorder %v965, 0.0
  %vm1034 = vcmp.gt.f32.partialorder %v968, 0.0
  %vm1035 = vcmp.gt.f32.partialorder %v971, 0.0
  %v1036 = vmul.f32 %v782, 4.0
  %v1037 = vmul.f32 %v785, 4.0
  %v1038 = vmul.f32 %v788, 4.0
  %v1039 = vmul.f32 %v791, 4.0
  %v1040 = vmul.f32 %v794, 4.0
  %v1041 = vmul.f32 %v797, 4.0
  %v1042 = vmul.f32 %v800, 4.0
  %v1043 = vmul.f32 %v803, 4.0
  %v1044 = vmul.f32 %v806, 4.0
  %v1045 = vmul.f32 %v809, 4.0
  %v1046 = vmul.f32 %v812, 4.0
  %v1047 = vmul.f32 %v815, 4.0
  %v1048 = vmul.f32 %v818, 4.0
  %v1049 = vmul.f32 %v821, 4.0
  %v1050 = vmul.f32 %v824, 4.0
  %v1051 = vmul.f32 %v827, 4.0
  %v1052 = vmul.f32 %v830, 4.0
  %v1053 = vmul.f32 %v833, 4.0
  %v1054 = vmul.f32 %v836, 4.0
  %v1055 = vmul.f32 %v839, 4.0
  %v1056 = vmul.f32 %v842, 4.0
  %v1057 = vmul.f32 %v845, 4.0
  %v1058 = vmul.f32 %v848, 4.0
  %v1059 = vmul.f32 %v851, 4.0
  %v1060 = vmul.f32 %v854, 4.0
  %v1061 = vmul.f32 %v857, 4.0
  %v1062 = vmul.f32 %v860, 4.0
  %v1063 = vmul.f32 %v863, 4.0
  %v1064 = vmul.f32 %v866, 4.0
  %v1065 = vmul.f32 %v869, 4.0
  %v1066 = vmul.f32 %v872, 4.0
  %v1067 = vmul.f32 %v875, 4.0
  %v1068 = vmul.f32 %v878, 4.0
  %v1069 = vmul.f32 %v881, 4.0
  %v1070 = vmul.f32 %v884, 4.0
  %v1071 = vmul.f32 %v887, 4.0
  %v1072 = vmul.f32 %v890, 4.0
  %v1073 = vmul.f32 %v893, 4.0
  %v1074 = vmul.f32 %v896, 4.0
  %v1075 = vmul.f32 %v899, 4.0
  %v1076 = vmul.f32 %v902, 4.0
  %v1077 = vmul.f32 %v905, 4.0
  %v1078 = vmul.f32 %v908, 4.0
  %v1079 = vmul.f32 %v911, 4.0
  %v1080 = vmul.f32 %v914, 4.0
  %v1081 = vmul.f32 %v917, 4.0
  %v1082 = vmul.f32 %v920, 4.0
  %v1083 = vmul.f32 %v923, 4.0
  %v1084 = vmul.f32 %v926, 4.0
  %v1085 = vmul.f32 %v929, 4.0
  %v1086 = vmul.f32 %v932, 4.0
  %v1087 = vmul.f32 %v935, 4.0
  %v1088 = vmul.f32 %v938, 4.0
  %v1089 = vmul.f32 %v941, 4.0
  %v1090 = vmul.f32 %v944, 4.0
  %v1091 = vmul.f32 %v947, 4.0
  %v1092 = vmul.f32 %v950, 4.0
  %v1093 = vmul.f32 %v953, 4.0
  %v1094 = vmul.f32 %v956, 4.0
  %v1095 = vmul.f32 %v959, 4.0
  %v1096 = vmul.f32 %v962, 4.0
  %v1097 = vmul.f32 %v965, 4.0
  %v1098 = vmul.f32 %v968, 4.0
  %v1099 = vmul.f32 %v971, 4.0
  %v1100 = vsel %vm972, %v1036, 1.0
  %v1101 = vsel %vm973, %v1037, 1.0
  %v1102 = vsel %vm974, %v1038, 1.0
  %v1103 = vsel %vm975, %v1039, 1.0
  %v1104 = vsel %vm976, %v1040, 1.0
  %v1105 = vsel %vm977, %v1041, 1.0
  %v1106 = vsel %vm978, %v1042, 1.0
  %v1107 = vsel %vm979, %v1043, 1.0
  %v1108 = vsel %vm980, %v1044, 1.0
  %v1109 = vsel %vm981, %v1045, 1.0
  %v1110 = vsel %vm982, %v1046, 1.0
  %v1111 = vsel %vm983, %v1047, 1.0
  %v1112 = vsel %vm984, %v1048, 1.0
  %v1113 = vsel %vm985, %v1049, 1.0
  %v1114 = vsel %vm986, %v1050, 1.0
  %v1115 = vsel %vm987, %v1051, 1.0
  %v1116 = vsel %vm988, %v1052, 1.0
  %v1117 = vsel %vm989, %v1053, 1.0
  %v1118 = vsel %vm990, %v1054, 1.0
  %v1119 = vsel %vm991, %v1055, 1.0
  %v1120 = vsel %vm992, %v1056, 1.0
  %v1121 = vsel %vm993, %v1057, 1.0
  %v1122 = vsel %vm994, %v1058, 1.0
  %v1123 = vsel %vm995, %v1059, 1.0
  %v1124 = vsel %vm996, %v1060, 1.0
  %v1125 = vsel %vm997, %v1061, 1.0
  %v1126 = vsel %vm998, %v1062, 1.0
  %v1127 = vsel %vm999, %v1063, 1.0
  %v1128 = vsel %vm1000, %v1064, 1.0
  %v1129 = vsel %vm1001, %v1065, 1.0
  %v1130 = vsel %vm1002, %v1066, 1.0
  %v1131 = vsel %vm1003, %v1067, 1.0
  %v1132 = vsel %vm1004, %v1068, 1.0
  %v1133 = vsel %vm1005, %v1069, 1.0
  %v1134 = vsel %vm1006, %v1070, 1.0
  %v1135 = vsel %vm1007, %v1071, 1.0
  %v1136 = vsel %vm1008, %v1072, 1.0
  %v1137 = vsel %vm1009, %v1073, 1.0
  %v1138 = vsel %vm1010, %v1074, 1.0
  %v1139 = vsel %vm1011, %v1075, 1.0
  %v1140 = vsel %vm1012, %v1076, 1.0
  %v1141 = vsel %vm1013, %v1077, 1.0
  %v1142 = vsel %vm1014, %v1078, 1.0
  %v1143 = vsel %vm1015, %v1079, 1.0
  %v1144 = vsel %vm1016, %v1080, 1.0
  %v1145 = vsel %vm1017, %v1081, 1.0
  %v1146 = vsel %vm1018, %v1082, 1.0
  %v1147 = vsel %vm1019, %v1083, 1.0
  %v1148 = vsel %vm1020, %v1084, 1.0
  %v1149 = vsel %vm1021, %v1085, 1.0
  %v1150 = vsel %vm1022, %v1086, 1.0
  %v1151 = vsel %vm1023, %v1087, 1.0
  %v1152 = vsel %vm1024, %v1088, 1.0
  %v1153 = vsel %vm1025, %v1089, 1.0
  %v1154 = vsel %vm1026, %v1090, 1.0
  %v1155 = vsel %vm1027, %v1091, 1.0
  %v1156 = vsel %vm1028, %v1092, 1.0
  %v1157 = vsel %vm1029, %v1093, 1.0
  %v1158 = vsel %vm1030, %v1094, 1.0
  %v1159 = vsel %vm1031, %v1095, 1.0
  %v1160 = vsel %vm1032, %v1096, 1.0
  %v1161 = vsel %vm1033, %v1097, 1.0
  %v1162 = vsel %vm1034, %v1098, 1.0
  %v1163 = vsel %vm1035, %v1099, 1.0
  %v1164 = vrcp.pop %v1100
  %v1165 = vrcp.pop %v1101
  %v1166 = vrcp.pop %v1102
  %v1167 = vrcp.pop %v1103
  %v1168 = vrcp.pop %v1104
  %v1169 = vrcp.pop %v1105
  %v1170 = vrcp.pop %v1106
  %v1171 = vrcp.pop %v1107
  %v1172 = vrcp.pop %v1108
  %v1173 = vrcp.pop %v1109
  %v1174 = vrcp.pop %v1110
  %v1175 = vrcp.pop %v1111
  %v1176 = vrcp.pop %v1112
  %v1177 = vrcp.pop %v1113
  %v1178 = vrcp.pop %v1114
  %v1179 = vrcp.pop %v1115
  %v1180 = vrcp.pop %v1116
  %v1181 = vrcp.pop %v1117
  %v1182 = vrcp.pop %v1118
  %v1183 = vrcp.pop %v1119
  %v1184 = vrcp.pop %v1120
  %v1185 = vrcp.pop %v1121
  %v1186 = vrcp.pop %v1122
  %v1187 = vrcp.pop %v1123
  %v1188 = vrcp.pop %v1124
  %v1189 = vrcp.pop %v1125
  %v1190 = vrcp.pop %v1126
  %v1191 = vrcp.pop %v1127
  %v1192 = vrcp.pop %v1128
  %v1193 = vrcp.pop %v1129
  %v1194 = vrcp.pop %v1130
  %v1195 = vrcp.pop %v1131
  %v1196 = vrcp.pop %v1132
  %v1197 = vrcp.pop %v1133
  %v1198 = vrcp.pop %v1134
  %v1199 = vrcp.pop %v1135
  %v1200 = vrcp.pop %v1136
  %v1201 = vrcp.pop %v1137
  %v1202 = vrcp.pop %v1138
  %v1203 = vrcp.pop %v1139
  %v1204 = vrcp.pop %v1140
  %v1205 = vrcp.pop %v1141
  %v1206 = vrcp.pop %v1142
  %v1207 = vrcp.pop %v1143
  %v1208 = vrcp.pop %v1144
  %v1209 = vrcp.pop %v1145
  %v1210 = vrcp.pop %v1146
  %v1211 = vrcp.pop %v1147
  %v1212 = vrcp.pop %v1148
  %v1213 = vrcp.pop %v1149
  %v1214 = vrcp.pop %v1150
  %v1215 = vrcp.pop %v1151
  %v1216 = vrcp.pop %v1152
  %v1217 = vrcp.pop %v1153
  %v1218 = vrcp.pop %v1154
  %v1219 = vrcp.pop %v1155
  %v1220 = vrcp.pop %v1156
  %v1221 = vrcp.pop %v1157
  %v1222 = vrcp.pop %v1158
  %v1223 = vrcp.pop %v1159
  %v1224 = vrcp.pop %v1160
  %v1225 = vrcp.pop %v1161
  %v1226 = vrcp.pop %v1162
  %v1227 = vrcp.pop %v1163
  %v1228 = vsel %vm972, %v1164, 0.0
  %v1229 = vsel %vm973, %v1165, 0.0
  %v1230 = vsel %vm974, %v1166, 0.0
  %v1231 = vsel %vm975, %v1167, 0.0
  %v1232 = vsel %vm976, %v1168, 0.0
  %v1233 = vsel %vm977, %v1169, 0.0
  %v1234 = vsel %vm978, %v1170, 0.0
  %v1235 = vsel %vm979, %v1171, 0.0
  %v1236 = vsel %vm980, %v1172, 0.0
  %v1237 = vsel %vm981, %v1173, 0.0
  %v1238 = vsel %vm982, %v1174, 0.0
  %v1239 = vsel %vm983, %v1175, 0.0
  %v1240 = vsel %vm984, %v1176, 0.0
  %v1241 = vsel %vm985, %v1177, 0.0
  %v1242 = vsel %vm986, %v1178, 0.0
  %v1243 = vsel %vm987, %v1179, 0.0
  %v1244 = vsel %vm988, %v1180, 0.0
  %v1245 = vsel %vm989, %v1181, 0.0
  %v1246 = vsel %vm990, %v1182, 0.0
  %v1247 = vsel %vm991, %v1183, 0.0
  %v1248 = vsel %vm992, %v1184, 0.0
  %v1249 = vsel %vm993, %v1185, 0.0
  %v1250 = vsel %vm994, %v1186, 0.0
  %v1251 = vsel %vm995, %v1187, 0.0
  %v1252 = vsel %vm996, %v1188, 0.0
  %v1253 = vsel %vm997, %v1189, 0.0
  %v1254 = vsel %vm998, %v1190, 0.0
  %v1255 = vsel %vm999, %v1191, 0.0
  %v1256 = vsel %vm1000, %v1192, 0.0
  %v1257 = vsel %vm1001, %v1193, 0.0
  %v1258 = vsel %vm1002, %v1194, 0.0
  %v1259 = vsel %vm1003, %v1195, 0.0
  %v1260 = vsel %vm1004, %v1196, 0.0
  %v1261 = vsel %vm1005, %v1197, 0.0
  %v1262 = vsel %vm1006, %v1198, 0.0
  %v1263 = vsel %vm1007, %v1199, 0.0
  %v1264 = vsel %vm1008, %v1200, 0.0
  %v1265 = vsel %vm1009, %v1201, 0.0
  %v1266 = vsel %vm1010, %v1202, 0.0
  %v1267 = vsel %vm1011, %v1203, 0.0
  %v1268 = vsel %vm1012, %v1204, 0.0
  %v1269 = vsel %vm1013, %v1205, 0.0
  %v1270 = vsel %vm1014, %v1206, 0.0
  %v1271 = vsel %vm1015, %v1207, 0.0
  %v1272 = vsel %vm1016, %v1208, 0.0
  %v1273 = vsel %vm1017, %v1209, 0.0
  %v1274 = vsel %vm1018, %v1210, 0.0
  %v1275 = vsel %vm1019, %v1211, 0.0
  %v1276 = vsel %vm1020, %v1212, 0.0
  %v1277 = vsel %vm1021, %v1213, 0.0
  %v1278 = vsel %vm1022, %v1214, 0.0
  %v1279 = vsel %vm1023, %v1215, 0.0
  %v1280 = vsel %vm1024, %v1216, 0.0
  %v1281 = vsel %vm1025, %v1217, 0.0
  %v1282 = vsel %vm1026, %v1218, 0.0
  %v1283 = vsel %vm1027, %v1219, 0.0
  %v1284 = vsel %vm1028, %v1220, 0.0
  %v1285 = vsel %vm1029, %v1221, 0.0
  %v1286 = vsel %vm1030, %v1222, 0.0
  %v1287 = vsel %vm1031, %v1223, 0.0
  %v1288 = vsel %vm1032, %v1224, 0.0
  %v1289 = vsel %vm1033, %v1225, 0.0
  %v1290 = vsel %vm1034, %v1226, 0.0
  %v1291 = vsel %vm1035, %v1227, 0.0
  %v1292 = vmul.f32 %v397, %v1228
  %v1293 = vmul.f32 %v400, %v1229
  %v1294 = vmul.f32 %v405, %v1230
  %v1295 = vmul.f32 %v408, %v1231
  %v1296 = vmul.f32 %v413, %v1232
  %v1297 = vmul.f32 %v416, %v1233
  %v1298 = vmul.f32 %v421, %v1234
  %v1299 = vmul.f32 %v424, %v1235
  %v1300 = vmul.f32 %v429, %v1236
  %v1301 = vmul.f32 %v432, %v1237
  %v1302 = vmul.f32 %v437, %v1238
  %v1303 = vmul.f32 %v440, %v1239
  %v1304 = vmul.f32 %v445, %v1240
  %v1305 = vmul.f32 %v448, %v1241
  %v1306 = vmul.f32 %v453, %v1242
  %v1307 = vmul.f32 %v456, %v1243
  %v1308 = vmul.f32 %v461, %v1244
  %v1309 = vmul.f32 %v464, %v1245
  %v1310 = vmul.f32 %v469, %v1246
  %v1311 = vmul.f32 %v472, %v1247
  %v1312 = vmul.f32 %v477, %v1248
  %v1313 = vmul.f32 %v480, %v1249
  %v1314 = vmul.f32 %v485, %v1250
  %v1315 = vmul.f32 %v488, %v1251
  %v1316 = vmul.f32 %v493, %v1252
  %v1317 = vmul.f32 %v496, %v1253
  %v1318 = vmul.f32 %v501, %v1254
  %v1319 = vmul.f32 %v504, %v1255
  %v1320 = vmul.f32 %v509, %v1256
  %v1321 = vmul.f32 %v512, %v1257
  %v1322 = vmul.f32 %v517, %v1258
  %v1323 = vmul.f32 %v520, %v1259
  %v1324 = vmul.f32 %v525, %v1260
  %v1325 = vmul.f32 %v528, %v1261
  %v1326 = vmul.f32 %v533, %v1262
  %v1327 = vmul.f32 %v536, %v1263
  %v1328 = vmul.f32 %v541, %v1264
  %v1329 = vmul.f32 %v544, %v1265
  %v1330 = vmul.f32 %v549, %v1266
  %v1331 = vmul.f32 %v552, %v1267
  %v1332 = vmul.f32 %v557, %v1268
  %v1333 = vmul.f32 %v560, %v1269
  %v1334 = vmul.f32 %v565, %v1270
  %v1335 = vmul.f32 %v568, %v1271
  %v1336 = vmul.f32 %v573, %v1272
  %v1337 = vmul.f32 %v576, %v1273
  %v1338 = vmul.f32 %v581, %v1274
  %v1339 = vmul.f32 %v584, %v1275
  %v1340 = vmul.f32 %v589, %v1276
  %v1341 = vmul.f32 %v592, %v1277
  %v1342 = vmul.f32 %v597, %v1278
  %v1343 = vmul.f32 %v600, %v1279
  %v1344 = vmul.f32 %v605, %v1280
  %v1345 = vmul.f32 %v608, %v1281
  %v1346 = vmul.f32 %v613, %v1282
  %v1347 = vmul.f32 %v616, %v1283
  %v1348 = vmul.f32 %v621, %v1284
  %v1349 = vmul.f32 %v624, %v1285
  %v1350 = vmul.f32 %v629, %v1286
  %v1351 = vmul.f32 %v632, %v1287
  %v1352 = vmul.f32 %v637, %v1288
  %v1353 = vmul.f32 %v640, %v1289
  %v1354 = vmul.f32 %v645, %v1290
  %v1355 = vmul.f32 %v648, %v1291
  %v1356 = vpack.c.bf16 %v1293, %v1292
  %v1357 = vpack.c.bf16 %v1295, %v1294
  %v1358 = vpack.c.bf16 %v1297, %v1296
  %v1359 = vpack.c.bf16 %v1299, %v1298
  %v1360 = vpack.c.bf16 %v1301, %v1300
  %v1361 = vpack.c.bf16 %v1303, %v1302
  %v1362 = vpack.c.bf16 %v1305, %v1304
  %v1363 = vpack.c.bf16 %v1307, %v1306
  %v1364 = vpack.c.bf16 %v1309, %v1308
  %v1365 = vpack.c.bf16 %v1311, %v1310
  %v1366 = vpack.c.bf16 %v1313, %v1312
  %v1367 = vpack.c.bf16 %v1315, %v1314
  %v1368 = vpack.c.bf16 %v1317, %v1316
  %v1369 = vpack.c.bf16 %v1319, %v1318
  %v1370 = vpack.c.bf16 %v1321, %v1320
  %v1371 = vpack.c.bf16 %v1323, %v1322
  %v1372 = vpack.c.bf16 %v1325, %v1324
  %v1373 = vpack.c.bf16 %v1327, %v1326
  %v1374 = vpack.c.bf16 %v1329, %v1328
  %v1375 = vpack.c.bf16 %v1331, %v1330
  %v1376 = vpack.c.bf16 %v1333, %v1332
  %v1377 = vpack.c.bf16 %v1335, %v1334
  %v1378 = vpack.c.bf16 %v1337, %v1336
  %v1379 = vpack.c.bf16 %v1339, %v1338
  %v1380 = vpack.c.bf16 %v1341, %v1340
  %v1381 = vpack.c.bf16 %v1343, %v1342
  %v1382 = vpack.c.bf16 %v1345, %v1344
  %v1383 = vpack.c.bf16 %v1347, %v1346
  %v1384 = vpack.c.bf16 %v1349, %v1348
  %v1385 = vpack.c.bf16 %v1351, %v1350
  %v1386 = vpack.c.bf16 %v1353, %v1352
  %v1387 = vpack.c.bf16 %v1355, %v1354
  %v1420 = vunpack.c.l.b16 %v1356
  %v1421 = vunpack.c.h.b16 %v1356
  %v1422 = vunpack.c.l.b16 %v1357
  %v1423 = vunpack.c.h.b16 %v1357
  %v1424 = vunpack.c.l.b16 %v1358
  %v1425 = vunpack.c.h.b16 %v1358
  %v1426 = vunpack.c.l.b16 %v1359
  %v1427 = vunpack.c.h.b16 %v1359
  %v1428 = vunpack.c.l.b16 %v1360
  %v1429 = vunpack.c.h.b16 %v1360
  %v1430 = vunpack.c.l.b16 %v1361
  %v1431 = vunpack.c.h.b16 %v1361
  %v1432 = vunpack.c.l.b16 %v1362
  %v1433 = vunpack.c.h.b16 %v1362
  %v1434 = vunpack.c.l.b16 %v1363
  %v1435 = vunpack.c.h.b16 %v1363
  %v1436 = vunpack.c.l.b16 %v1364
  %v1437 = vunpack.c.h.b16 %v1364
  %v1438 = vunpack.c.l.b16 %v1365
  %v1439 = vunpack.c.h.b16 %v1365
  %v1440 = vunpack.c.l.b16 %v1366
  %v1441 = vunpack.c.h.b16 %v1366
  %v1442 = vunpack.c.l.b16 %v1367
  %v1443 = vunpack.c.h.b16 %v1367
  %v1444 = vunpack.c.l.b16 %v1368
  %v1445 = vunpack.c.h.b16 %v1368
  %v1446 = vunpack.c.l.b16 %v1369
  %v1447 = vunpack.c.h.b16 %v1369
  %v1448 = vunpack.c.l.b16 %v1370
  %v1449 = vunpack.c.h.b16 %v1370
  %v1450 = vunpack.c.l.b16 %v1371
  %v1451 = vunpack.c.h.b16 %v1371
  %v1452 = vunpack.c.l.b16 %v1372
  %v1453 = vunpack.c.h.b16 %v1372
  %v1454 = vunpack.c.l.b16 %v1373
  %v1455 = vunpack.c.h.b16 %v1373
  %v1456 = vunpack.c.l.b16 %v1374
  %v1457 = vunpack.c.h.b16 %v1374
  %v1458 = vunpack.c.l.b16 %v1375
  %v1459 = vunpack.c.h.b16 %v1375
  %v1460 = vunpack.c.l.b16 %v1376
  %v1461 = vunpack.c.h.b16 %v1376
  %v1462 = vunpack.c.l.b16 %v1377
  %v1463 = vunpack.c.h.b16 %v1377
  %v1464 = vunpack.c.l.b16 %v1378
  %v1465 = vunpack.c.h.b16 %v1378
  %v1466 = vunpack.c.l.b16 %v1379
  %v1467 = vunpack.c.h.b16 %v1379
  %v1468 = vunpack.c.l.b16 %v1380
  %v1469 = vunpack.c.h.b16 %v1380
  %v1470 = vunpack.c.l.b16 %v1381
  %v1471 = vunpack.c.h.b16 %v1381
  %v1472 = vunpack.c.l.b16 %v1382
  %v1473 = vunpack.c.h.b16 %v1382
  %v1474 = vunpack.c.l.b16 %v1383
  %v1475 = vunpack.c.h.b16 %v1383
  %v1476 = vunpack.c.l.b16 %v1384
  %v1477 = vunpack.c.h.b16 %v1384
  %v1478 = vunpack.c.l.b16 %v1385
  %v1479 = vunpack.c.h.b16 %v1385
  %v1480 = vunpack.c.l.b16 %v1386
  %v1481 = vunpack.c.h.b16 %v1386
  %v1482 = vunpack.c.l.b16 %v1387
  %v1483 = vunpack.c.h.b16 %v1387
  %v1484 = vpack.c.b16 %v1420, %v1420
  %v1485 = vpack.c.b16 %v1421, %v1421
  %v1486 = vpack.c.b16 %v1422, %v1422
  %v1487 = vpack.c.b16 %v1423, %v1423
  %v1488 = vpack.c.b16 %v1424, %v1424
  %v1489 = vpack.c.b16 %v1425, %v1425
  %v1490 = vpack.c.b16 %v1426, %v1426
  %v1491 = vpack.c.b16 %v1427, %v1427
  %v1492 = vpack.c.b16 %v1428, %v1428
  %v1493 = vpack.c.b16 %v1429, %v1429
  %v1494 = vpack.c.b16 %v1430, %v1430
  %v1495 = vpack.c.b16 %v1431, %v1431
  %v1496 = vpack.c.b16 %v1432, %v1432
  %v1497 = vpack.c.b16 %v1433, %v1433
  %v1498 = vpack.c.b16 %v1434, %v1434
  %v1499 = vpack.c.b16 %v1435, %v1435
  %v1500 = vpack.c.b16 %v1436, %v1436
  %v1501 = vpack.c.b16 %v1437, %v1437
  %v1502 = vpack.c.b16 %v1438, %v1438
  %v1503 = vpack.c.b16 %v1439, %v1439
  %v1504 = vpack.c.b16 %v1440, %v1440
  %v1505 = vpack.c.b16 %v1441, %v1441
  %v1506 = vpack.c.b16 %v1442, %v1442
  %v1507 = vpack.c.b16 %v1443, %v1443
  %v1508 = vpack.c.b16 %v1444, %v1444
  %v1509 = vpack.c.b16 %v1445, %v1445
  %v1510 = vpack.c.b16 %v1446, %v1446
  %v1511 = vpack.c.b16 %v1447, %v1447
  %v1512 = vpack.c.b16 %v1448, %v1448
  %v1513 = vpack.c.b16 %v1449, %v1449
  %v1514 = vpack.c.b16 %v1450, %v1450
  %v1515 = vpack.c.b16 %v1451, %v1451
  %v1516 = vpack.c.b16 %v1452, %v1452
  %v1517 = vpack.c.b16 %v1453, %v1453
  %v1518 = vpack.c.b16 %v1454, %v1454
  %v1519 = vpack.c.b16 %v1455, %v1455
  %v1520 = vpack.c.b16 %v1456, %v1456
  %v1521 = vpack.c.b16 %v1457, %v1457
  %v1522 = vpack.c.b16 %v1458, %v1458
  %v1523 = vpack.c.b16 %v1459, %v1459
  %v1524 = vpack.c.b16 %v1460, %v1460
  %v1525 = vpack.c.b16 %v1461, %v1461
  %v1526 = vpack.c.b16 %v1462, %v1462
  %v1527 = vpack.c.b16 %v1463, %v1463
  %v1528 = vpack.c.b16 %v1464, %v1464
  %v1529 = vpack.c.b16 %v1465, %v1465
  %v1530 = vpack.c.b16 %v1466, %v1466
  %v1531 = vpack.c.b16 %v1467, %v1467
  %v1532 = vpack.c.b16 %v1468, %v1468
  %v1533 = vpack.c.b16 %v1469, %v1469
  %v1534 = vpack.c.b16 %v1470, %v1470
  %v1535 = vpack.c.b16 %v1471, %v1471
  %v1536 = vpack.c.b16 %v1472, %v1472
  %v1537 = vpack.c.b16 %v1473, %v1473
  %v1538 = vpack.c.b16 %v1474, %v1474
  %v1539 = vpack.c.b16 %v1475, %v1475
  %v1540 = vpack.c.b16 %v1476, %v1476
  %v1541 = vpack.c.b16 %v1477, %v1477
  %v1542 = vpack.c.b16 %v1478, %v1478
  %v1543 = vpack.c.b16 %v1479, %v1479
  %v1544 = vpack.c.b16 %v1480, %v1480
  %v1545 = vpack.c.b16 %v1481, %v1481
  %v1546 = vpack.c.b16 %v1482, %v1482
  %v1547 = vpack.c.b16 %v1483, %v1483
  %vm1612 = vcmask 60416
  %1613 = vst.msk [vmem:[%s3] sm:$0xf] %vm1612, %v1484
  %1614 = vst.msk [vmem:[%s3 + $0x4] sm:$0xf] %vm1612, %v1485
  %1615 = vst.msk [vmem:[%s3 + $0x8] sm:$0xf] %vm1612, %v1486
  %1616 = vst.msk [vmem:[%s3 + $0xc] sm:$0xf] %vm1612, %v1487
  %1617 = vst.msk [vmem:[%s3 + $0x10] sm:$0xf] %vm1612, %v1488
  %1618 = vst.msk [vmem:[%s3 + $0x14] sm:$0xf] %vm1612, %v1489
  %1619 = vst.msk [vmem:[%s3 + $0x18] sm:$0xf] %vm1612, %v1490
  %1620 = vst.msk [vmem:[%s3 + $0x1c] sm:$0xf] %vm1612, %v1491
  %1621 = vst.msk [vmem:[%s3 + $0x20] sm:$0xf] %vm1612, %v1492
  %1622 = vst.msk [vmem:[%s3 + $0x24] sm:$0xf] %vm1612, %v1493
  %1623 = vst.msk [vmem:[%s3 + $0x28] sm:$0xf] %vm1612, %v1494
  %1624 = vst.msk [vmem:[%s3 + $0x2c] sm:$0xf] %vm1612, %v1495
  %1625 = vst.msk [vmem:[%s3 + $0x30] sm:$0xf] %vm1612, %v1496
  %1626 = vst.msk [vmem:[%s3 + $0x34] sm:$0xf] %vm1612, %v1497
  %1627 = vst.msk [vmem:[%s3 + $0x38] sm:$0xf] %vm1612, %v1498
  %1628 = vst.msk [vmem:[%s3 + $0x3c] sm:$0xf] %vm1612, %v1499
  %1629 = vst.msk [vmem:[%s3 + $0x40] sm:$0xf] %vm1612, %v1500
  %1630 = vst.msk [vmem:[%s3 + $0x44] sm:$0xf] %vm1612, %v1501
  %1631 = vst.msk [vmem:[%s3 + $0x48] sm:$0xf] %vm1612, %v1502
  %1632 = vst.msk [vmem:[%s3 + $0x4c] sm:$0xf] %vm1612, %v1503
  %1633 = vst.msk [vmem:[%s3 + $0x50] sm:$0xf] %vm1612, %v1504
  %1634 = vst.msk [vmem:[%s3 + $0x54] sm:$0xf] %vm1612, %v1505
  %1635 = vst.msk [vmem:[%s3 + $0x58] sm:$0xf] %vm1612, %v1506
  %1636 = vst.msk [vmem:[%s3 + $0x5c] sm:$0xf] %vm1612, %v1507
  %1637 = vst.msk [vmem:[%s3 + $0x60] sm:$0xf] %vm1612, %v1508
  %1638 = vst.msk [vmem:[%s3 + $0x64] sm:$0xf] %vm1612, %v1509
  %1639 = vst.msk [vmem:[%s3 + $0x68] sm:$0xf] %vm1612, %v1510
  %1640 = vst.msk [vmem:[%s3 + $0x6c] sm:$0xf] %vm1612, %v1511
  %1641 = vst.msk [vmem:[%s3 + $0x70] sm:$0xf] %vm1612, %v1512
  %1642 = vst.msk [vmem:[%s3 + $0x74] sm:$0xf] %vm1612, %v1513
  %1643 = vst.msk [vmem:[%s3 + $0x78] sm:$0xf] %vm1612, %v1514
  %1644 = vst.msk [vmem:[%s3 + $0x7c] sm:$0xf] %vm1612, %v1515
  %1645 = vst.msk [vmem:[%s3 + $0x80] sm:$0xf] %vm1612, %v1516
  %1646 = vst.msk [vmem:[%s3 + $0x84] sm:$0xf] %vm1612, %v1517
  %1647 = vst.msk [vmem:[%s3 + $0x88] sm:$0xf] %vm1612, %v1518
  %1648 = vst.msk [vmem:[%s3 + $0x8c] sm:$0xf] %vm1612, %v1519
  %1649 = vst.msk [vmem:[%s3 + $0x90] sm:$0xf] %vm1612, %v1520
  %1650 = vst.msk [vmem:[%s3 + $0x94] sm:$0xf] %vm1612, %v1521
  %1651 = vst.msk [vmem:[%s3 + $0x98] sm:$0xf] %vm1612, %v1522
  %1652 = vst.msk [vmem:[%s3 + $0x9c] sm:$0xf] %vm1612, %v1523
  %1653 = vst.msk [vmem:[%s3 + $0xa0] sm:$0xf] %vm1612, %v1524
  %1654 = vst.msk [vmem:[%s3 + $0xa4] sm:$0xf] %vm1612, %v1525
  %1655 = vst.msk [vmem:[%s3 + $0xa8] sm:$0xf] %vm1612, %v1526
  %1656 = vst.msk [vmem:[%s3 + $0xac] sm:$0xf] %vm1612, %v1527
  %1657 = vst.msk [vmem:[%s3 + $0xb0] sm:$0xf] %vm1612, %v1528
  %1658 = vst.msk [vmem:[%s3 + $0xb4] sm:$0xf] %vm1612, %v1529
  %1659 = vst.msk [vmem:[%s3 + $0xb8] sm:$0xf] %vm1612, %v1530
  %1660 = vst.msk [vmem:[%s3 + $0xbc] sm:$0xf] %vm1612, %v1531
  %1661 = vst.msk [vmem:[%s3 + $0xc0] sm:$0xf] %vm1612, %v1532
  %1662 = vst.msk [vmem:[%s3 + $0xc4] sm:$0xf] %vm1612, %v1533
  %1663 = vst.msk [vmem:[%s3 + $0xc8] sm:$0xf] %vm1612, %v1534
  %1664 = vst.msk [vmem:[%s3 + $0xcc] sm:$0xf] %vm1612, %v1535
  %1665 = vst.msk [vmem:[%s3 + $0xd0] sm:$0xf] %vm1612, %v1536
  %1666 = vst.msk [vmem:[%s3 + $0xd4] sm:$0xf] %vm1612, %v1537
  %1667 = vst.msk [vmem:[%s3 + $0xd8] sm:$0xf] %vm1612, %v1538
  %1668 = vst.msk [vmem:[%s3 + $0xdc] sm:$0xf] %vm1612, %v1539
  %1669 = vst.msk [vmem:[%s3 + $0xe0] sm:$0xf] %vm1612, %v1540
  %1670 = vst.msk [vmem:[%s3 + $0xe4] sm:$0xf] %vm1612, %v1541
  %1671 = vst.msk [vmem:[%s3 + $0xe8] sm:$0xf] %vm1612, %v1542
  %1672 = vst.msk [vmem:[%s3 + $0xec] sm:$0xf] %vm1612, %v1543
  %1673 = vst.msk [vmem:[%s3 + $0xf0] sm:$0xf] %vm1612, %v1544
  %1674 = vst.msk [vmem:[%s3 + $0xf4] sm:$0xf] %vm1612, %v1545
  %1675 = vst.msk [vmem:[%s3 + $0xf8] sm:$0xf] %vm1612, %v1546
  %1676 = vst.msk [vmem:[%s3 + $0xfc] sm:$0xf] %vm1612, %v1547
  %vm1677 = vcmask 64512
  %1678 = vst.msk [vmem:[%s4] sm:$0xff] %vm1677, 0.0
  %v1679 = vsel %vm1677, %v1292, 0.0
  %v1680 = vsel %vm1677, %v1293, 0.0
  %v1681 = vadd.f32 %v1679, %v1680
  %v1682 = vsel %vm1677, %v1294, 0.0
  %v1683 = vadd.f32 %v1681, %v1682
  %v1684 = vsel %vm1677, %v1295, 0.0
  %v1685 = vadd.f32 %v1683, %v1684
  %v1686 = vsel %vm1677, %v1296, 0.0
  %v1687 = vadd.f32 %v1685, %v1686
  %v1688 = vsel %vm1677, %v1297, 0.0
  %v1689 = vadd.f32 %v1687, %v1688
  %v1690 = vsel %vm1677, %v1298, 0.0
  %v1691 = vadd.f32 %v1689, %v1690
  %v1692 = vsel %vm1677, %v1299, 0.0
  %v1693 = vadd.f32 %v1691, %v1692
  %v1694 = vsel %vm1677, %v1300, 0.0
  %v1695 = vadd.f32 %v1693, %v1694
  %v1696 = vsel %vm1677, %v1301, 0.0
  %v1697 = vadd.f32 %v1695, %v1696
  %v1698 = vsel %vm1677, %v1302, 0.0
  %v1699 = vadd.f32 %v1697, %v1698
  %v1700 = vsel %vm1677, %v1303, 0.0
  %v1701 = vadd.f32 %v1699, %v1700
  %v1702 = vsel %vm1677, %v1304, 0.0
  %v1703 = vadd.f32 %v1701, %v1702
  %v1704 = vsel %vm1677, %v1305, 0.0
  %v1705 = vadd.f32 %v1703, %v1704
  %v1706 = vsel %vm1677, %v1306, 0.0
  %v1707 = vadd.f32 %v1705, %v1706
  %v1708 = vsel %vm1677, %v1307, 0.0
  %v1709 = vadd.f32 %v1707, %v1708
  %v1710 = vsel %vm1677, %v1308, 0.0
  %v1711 = vadd.f32 %v1709, %v1710
  %v1712 = vsel %vm1677, %v1309, 0.0
  %v1713 = vadd.f32 %v1711, %v1712
  %v1714 = vsel %vm1677, %v1310, 0.0
  %v1715 = vadd.f32 %v1713, %v1714
  %v1716 = vsel %vm1677, %v1311, 0.0
  %v1717 = vadd.f32 %v1715, %v1716
  %v1718 = vsel %vm1677, %v1312, 0.0
  %v1719 = vadd.f32 %v1717, %v1718
  %v1720 = vsel %vm1677, %v1313, 0.0
  %v1721 = vadd.f32 %v1719, %v1720
  %v1722 = vsel %vm1677, %v1314, 0.0
  %v1723 = vadd.f32 %v1721, %v1722
  %v1724 = vsel %vm1677, %v1315, 0.0
  %v1725 = vadd.f32 %v1723, %v1724
  %v1726 = vsel %vm1677, %v1316, 0.0
  %v1727 = vadd.f32 %v1725, %v1726
  %v1728 = vsel %vm1677, %v1317, 0.0
  %v1729 = vadd.f32 %v1727, %v1728
  %v1730 = vsel %vm1677, %v1318, 0.0
  %v1731 = vadd.f32 %v1729, %v1730
  %v1732 = vsel %vm1677, %v1319, 0.0
  %v1733 = vadd.f32 %v1731, %v1732
  %v1734 = vsel %vm1677, %v1320, 0.0
  %v1735 = vadd.f32 %v1733, %v1734
  %v1736 = vsel %vm1677, %v1321, 0.0
  %v1737 = vadd.f32 %v1735, %v1736
  %v1738 = vsel %vm1677, %v1322, 0.0
  %v1739 = vadd.f32 %v1737, %v1738
  %v1740 = vsel %vm1677, %v1323, 0.0
  %v1741 = vadd.f32 %v1739, %v1740
  %v1742 = vsel %vm1677, %v1324, 0.0
  %v1743 = vadd.f32 %v1741, %v1742
  %v1744 = vsel %vm1677, %v1325, 0.0
  %v1745 = vadd.f32 %v1743, %v1744
  %v1746 = vsel %vm1677, %v1326, 0.0
  %v1747 = vadd.f32 %v1745, %v1746
  %v1748 = vsel %vm1677, %v1327, 0.0
  %v1749 = vadd.f32 %v1747, %v1748
  %v1750 = vsel %vm1677, %v1328, 0.0
  %v1751 = vadd.f32 %v1749, %v1750
  %v1752 = vsel %vm1677, %v1329, 0.0
  %v1753 = vadd.f32 %v1751, %v1752
  %v1754 = vsel %vm1677, %v1330, 0.0
  %v1755 = vadd.f32 %v1753, %v1754
  %v1756 = vsel %vm1677, %v1331, 0.0
  %v1757 = vadd.f32 %v1755, %v1756
  %v1758 = vsel %vm1677, %v1332, 0.0
  %v1759 = vadd.f32 %v1757, %v1758
  %v1760 = vsel %vm1677, %v1333, 0.0
  %v1761 = vadd.f32 %v1759, %v1760
  %v1762 = vsel %vm1677, %v1334, 0.0
  %v1763 = vadd.f32 %v1761, %v1762
  %v1764 = vsel %vm1677, %v1335, 0.0
  %v1765 = vadd.f32 %v1763, %v1764
  %v1766 = vsel %vm1677, %v1336, 0.0
  %v1767 = vadd.f32 %v1765, %v1766
  %v1768 = vsel %vm1677, %v1337, 0.0
  %v1769 = vadd.f32 %v1767, %v1768
  %v1770 = vsel %vm1677, %v1338, 0.0
  %v1771 = vadd.f32 %v1769, %v1770
  %v1772 = vsel %vm1677, %v1339, 0.0
  %v1773 = vadd.f32 %v1771, %v1772
  %v1774 = vsel %vm1677, %v1340, 0.0
  %v1775 = vadd.f32 %v1773, %v1774
  %v1776 = vsel %vm1677, %v1341, 0.0
  %v1777 = vadd.f32 %v1775, %v1776
  %v1778 = vsel %vm1677, %v1342, 0.0
  %v1779 = vadd.f32 %v1777, %v1778
  %v1780 = vsel %vm1677, %v1343, 0.0
  %v1781 = vadd.f32 %v1779, %v1780
  %v1782 = vsel %vm1677, %v1344, 0.0
  %v1783 = vadd.f32 %v1781, %v1782
  %v1784 = vsel %vm1677, %v1345, 0.0
  %v1785 = vadd.f32 %v1783, %v1784
  %v1786 = vsel %vm1677, %v1346, 0.0
  %v1787 = vadd.f32 %v1785, %v1786
  %v1788 = vsel %vm1677, %v1347, 0.0
  %v1789 = vadd.f32 %v1787, %v1788
  %v1790 = vsel %vm1677, %v1348, 0.0
  %v1791 = vadd.f32 %v1789, %v1790
  %v1792 = vsel %vm1677, %v1349, 0.0
  %v1793 = vadd.f32 %v1791, %v1792
  %v1794 = vsel %vm1677, %v1350, 0.0
  %v1795 = vadd.f32 %v1793, %v1794
  %v1796 = vsel %vm1677, %v1351, 0.0
  %v1797 = vadd.f32 %v1795, %v1796
  %v1798 = vsel %vm1677, %v1352, 0.0
  %v1799 = vadd.f32 %v1797, %v1798
  %v1800 = vsel %vm1677, %v1353, 0.0
  %v1801 = vadd.f32 %v1799, %v1800
  %v1802 = vsel %vm1677, %v1354, 0.0
  %v1803 = vadd.f32 %v1801, %v1802
  %v1804 = vsel %vm1677, %v1355, 0.0
  %v1805 = vadd.f32 %v1803, %v1804
  %v1806 = vrot.slane %v1805, 4
  %v1807 = vadd.f32 %v1805, %v1806
  %v1808 = vrot.slane %v1807, 2
  %v1809 = vadd.f32 %v1807, %v1808
  %v1810 = vrot.slane %v1809, 1
  %v1811 = vadd.f32 %v1809, %v1810
  %vm1812 = vcmask 57344
  %1813 = vst.msk [vmem:[%s4] sm:$0x1] %vm1812, %v1811
  %v1814 = vmul.f32 %v1292, %v1292
  %v1815 = vmul.f32 %v1293, %v1293
  %v1816 = vmul.f32 %v1294, %v1294
  %v1817 = vmul.f32 %v1295, %v1295
  %v1818 = vmul.f32 %v1296, %v1296
  %v1819 = vmul.f32 %v1297, %v1297
  %v1820 = vmul.f32 %v1298, %v1298
  %v1821 = vmul.f32 %v1299, %v1299
  %v1822 = vmul.f32 %v1300, %v1300
  %v1823 = vmul.f32 %v1301, %v1301
  %v1824 = vmul.f32 %v1302, %v1302
  %v1825 = vmul.f32 %v1303, %v1303
  %v1826 = vmul.f32 %v1304, %v1304
  %v1827 = vmul.f32 %v1305, %v1305
  %v1828 = vmul.f32 %v1306, %v1306
  %v1829 = vmul.f32 %v1307, %v1307
  %v1830 = vmul.f32 %v1308, %v1308
  %v1831 = vmul.f32 %v1309, %v1309
  %v1832 = vmul.f32 %v1310, %v1310
  %v1833 = vmul.f32 %v1311, %v1311
  %v1834 = vmul.f32 %v1312, %v1312
  %v1835 = vmul.f32 %v1313, %v1313
  %v1836 = vmul.f32 %v1314, %v1314
  %v1837 = vmul.f32 %v1315, %v1315
  %v1838 = vmul.f32 %v1316, %v1316
  %v1839 = vmul.f32 %v1317, %v1317
  %v1840 = vmul.f32 %v1318, %v1318
  %v1841 = vmul.f32 %v1319, %v1319
  %v1842 = vmul.f32 %v1320, %v1320
  %v1843 = vmul.f32 %v1321, %v1321
  %v1844 = vmul.f32 %v1322, %v1322
  %v1845 = vmul.f32 %v1323, %v1323
  %v1846 = vmul.f32 %v1324, %v1324
  %v1847 = vmul.f32 %v1325, %v1325
  %v1848 = vmul.f32 %v1326, %v1326
  %v1849 = vmul.f32 %v1327, %v1327
  %v1850 = vmul.f32 %v1328, %v1328
  %v1851 = vmul.f32 %v1329, %v1329
  %v1852 = vmul.f32 %v1330, %v1330
  %v1853 = vmul.f32 %v1331, %v1331
  %v1854 = vmul.f32 %v1332, %v1332
  %v1855 = vmul.f32 %v1333, %v1333
  %v1856 = vmul.f32 %v1334, %v1334
  %v1857 = vmul.f32 %v1335, %v1335
  %v1858 = vmul.f32 %v1336, %v1336
  %v1859 = vmul.f32 %v1337, %v1337
  %v1860 = vmul.f32 %v1338, %v1338
  %v1861 = vmul.f32 %v1339, %v1339
  %v1862 = vmul.f32 %v1340, %v1340
  %v1863 = vmul.f32 %v1341, %v1341
  %v1864 = vmul.f32 %v1342, %v1342
  %v1865 = vmul.f32 %v1343, %v1343
  %v1866 = vmul.f32 %v1344, %v1344
  %v1867 = vmul.f32 %v1345, %v1345
  %v1868 = vmul.f32 %v1346, %v1346
  %v1869 = vmul.f32 %v1347, %v1347
  %v1870 = vmul.f32 %v1348, %v1348
  %v1871 = vmul.f32 %v1349, %v1349
  %v1872 = vmul.f32 %v1350, %v1350
  %v1873 = vmul.f32 %v1351, %v1351
  %v1874 = vmul.f32 %v1352, %v1352
  %v1875 = vmul.f32 %v1353, %v1353
  %v1876 = vmul.f32 %v1354, %v1354
  %v1877 = vmul.f32 %v1355, %v1355
  %v1878 = vsel %vm1677, %v1814, 0.0
  %v1879 = vsel %vm1677, %v1815, 0.0
  %v1880 = vadd.f32 %v1878, %v1879
  %v1881 = vsel %vm1677, %v1816, 0.0
  %v1882 = vadd.f32 %v1880, %v1881
  %v1883 = vsel %vm1677, %v1817, 0.0
  %v1884 = vadd.f32 %v1882, %v1883
  %v1885 = vsel %vm1677, %v1818, 0.0
  %v1886 = vadd.f32 %v1884, %v1885
  %v1887 = vsel %vm1677, %v1819, 0.0
  %v1888 = vadd.f32 %v1886, %v1887
  %v1889 = vsel %vm1677, %v1820, 0.0
  %v1890 = vadd.f32 %v1888, %v1889
  %v1891 = vsel %vm1677, %v1821, 0.0
  %v1892 = vadd.f32 %v1890, %v1891
  %v1893 = vsel %vm1677, %v1822, 0.0
  %v1894 = vadd.f32 %v1892, %v1893
  %v1895 = vsel %vm1677, %v1823, 0.0
  %v1896 = vadd.f32 %v1894, %v1895
  %v1897 = vsel %vm1677, %v1824, 0.0
  %v1898 = vadd.f32 %v1896, %v1897
  %v1899 = vsel %vm1677, %v1825, 0.0
  %v1900 = vadd.f32 %v1898, %v1899
  %v1901 = vsel %vm1677, %v1826, 0.0
  %v1902 = vadd.f32 %v1900, %v1901
  %v1903 = vsel %vm1677, %v1827, 0.0
  %v1904 = vadd.f32 %v1902, %v1903
  %v1905 = vsel %vm1677, %v1828, 0.0
  %v1906 = vadd.f32 %v1904, %v1905
  %v1907 = vsel %vm1677, %v1829, 0.0
  %v1908 = vadd.f32 %v1906, %v1907
  %v1909 = vsel %vm1677, %v1830, 0.0
  %v1910 = vadd.f32 %v1908, %v1909
  %v1911 = vsel %vm1677, %v1831, 0.0
  %v1912 = vadd.f32 %v1910, %v1911
  %v1913 = vsel %vm1677, %v1832, 0.0
  %v1914 = vadd.f32 %v1912, %v1913
  %v1915 = vsel %vm1677, %v1833, 0.0
  %v1916 = vadd.f32 %v1914, %v1915
  %v1917 = vsel %vm1677, %v1834, 0.0
  %v1918 = vadd.f32 %v1916, %v1917
  %v1919 = vsel %vm1677, %v1835, 0.0
  %v1920 = vadd.f32 %v1918, %v1919
  %v1921 = vsel %vm1677, %v1836, 0.0
  %v1922 = vadd.f32 %v1920, %v1921
  %v1923 = vsel %vm1677, %v1837, 0.0
  %v1924 = vadd.f32 %v1922, %v1923
  %v1925 = vsel %vm1677, %v1838, 0.0
  %v1926 = vadd.f32 %v1924, %v1925
  %v1927 = vsel %vm1677, %v1839, 0.0
  %v1928 = vadd.f32 %v1926, %v1927
  %v1929 = vsel %vm1677, %v1840, 0.0
  %v1930 = vadd.f32 %v1928, %v1929
  %v1931 = vsel %vm1677, %v1841, 0.0
  %v1932 = vadd.f32 %v1930, %v1931
  %v1933 = vsel %vm1677, %v1842, 0.0
  %v1934 = vadd.f32 %v1932, %v1933
  %v1935 = vsel %vm1677, %v1843, 0.0
  %v1936 = vadd.f32 %v1934, %v1935
  %v1937 = vsel %vm1677, %v1844, 0.0
  %v1938 = vadd.f32 %v1936, %v1937
  %v1939 = vsel %vm1677, %v1845, 0.0
  %v1940 = vadd.f32 %v1938, %v1939
  %v1941 = vsel %vm1677, %v1846, 0.0
  %v1942 = vadd.f32 %v1940, %v1941
  %v1943 = vsel %vm1677, %v1847, 0.0
  %v1944 = vadd.f32 %v1942, %v1943
  %v1945 = vsel %vm1677, %v1848, 0.0
  %v1946 = vadd.f32 %v1944, %v1945
  %v1947 = vsel %vm1677, %v1849, 0.0
  %v1948 = vadd.f32 %v1946, %v1947
  %v1949 = vsel %vm1677, %v1850, 0.0
  %v1950 = vadd.f32 %v1948, %v1949
  %v1951 = vsel %vm1677, %v1851, 0.0
  %v1952 = vadd.f32 %v1950, %v1951
  %v1953 = vsel %vm1677, %v1852, 0.0
  %v1954 = vadd.f32 %v1952, %v1953
  %v1955 = vsel %vm1677, %v1853, 0.0
  %v1956 = vadd.f32 %v1954, %v1955
  %v1957 = vsel %vm1677, %v1854, 0.0
  %v1958 = vadd.f32 %v1956, %v1957
  %v1959 = vsel %vm1677, %v1855, 0.0
  %v1960 = vadd.f32 %v1958, %v1959
  %v1961 = vsel %vm1677, %v1856, 0.0
  %v1962 = vadd.f32 %v1960, %v1961
  %v1963 = vsel %vm1677, %v1857, 0.0
  %v1964 = vadd.f32 %v1962, %v1963
  %v1965 = vsel %vm1677, %v1858, 0.0
  %v1966 = vadd.f32 %v1964, %v1965
  %v1967 = vsel %vm1677, %v1859, 0.0
  %v1968 = vadd.f32 %v1966, %v1967
  %v1969 = vsel %vm1677, %v1860, 0.0
  %v1970 = vadd.f32 %v1968, %v1969
  %v1971 = vsel %vm1677, %v1861, 0.0
  %v1972 = vadd.f32 %v1970, %v1971
  %v1973 = vsel %vm1677, %v1862, 0.0
  %v1974 = vadd.f32 %v1972, %v1973
  %v1975 = vsel %vm1677, %v1863, 0.0
  %v1976 = vadd.f32 %v1974, %v1975
  %v1977 = vsel %vm1677, %v1864, 0.0
  %v1978 = vadd.f32 %v1976, %v1977
  %v1979 = vsel %vm1677, %v1865, 0.0
  %v1980 = vadd.f32 %v1978, %v1979
  %v1981 = vsel %vm1677, %v1866, 0.0
  %v1982 = vadd.f32 %v1980, %v1981
  %v1983 = vsel %vm1677, %v1867, 0.0
  %v1984 = vadd.f32 %v1982, %v1983
  %v1985 = vsel %vm1677, %v1868, 0.0
  %v1986 = vadd.f32 %v1984, %v1985
  %v1987 = vsel %vm1677, %v1869, 0.0
  %v1988 = vadd.f32 %v1986, %v1987
  %v1989 = vsel %vm1677, %v1870, 0.0
  %v1990 = vadd.f32 %v1988, %v1989
  %v1991 = vsel %vm1677, %v1871, 0.0
  %v1992 = vadd.f32 %v1990, %v1991
  %v1993 = vsel %vm1677, %v1872, 0.0
  %v1994 = vadd.f32 %v1992, %v1993
  %v1995 = vsel %vm1677, %v1873, 0.0
  %v1996 = vadd.f32 %v1994, %v1995
  %v1997 = vsel %vm1677, %v1874, 0.0
  %v1998 = vadd.f32 %v1996, %v1997
  %v1999 = vsel %vm1677, %v1875, 0.0
  %v2000 = vadd.f32 %v1998, %v1999
  %v2001 = vsel %vm1677, %v1876, 0.0
  %v2002 = vadd.f32 %v2000, %v2001
  %v2003 = vsel %vm1677, %v1877, 0.0
  %v2004 = vadd.f32 %v2002, %v2003
  %v2005 = vrot.slane %v2004, 4
  %v2006 = vadd.f32 %v2004, %v2005
  %v2007 = vrot.slane %v2006, 2
  %v2008 = vadd.f32 %v2006, %v2007
  %v2009 = vrot.slane %v2008, 1
  %v2010 = vadd.f32 %v2008, %v2009
  %2011 = vst.msk [vmem:[%s4 + $0x1] sm:$0x1] %vm1812, %v2010
  // Predicated region
  $region14: #{pcbactiv_forward.2} parent=0 // pred_check
    _
  $region15: #{pcbactiv_forward.2} parent=0 // pred_check_branch
    %2013 = sbr.rel (0) target = $region17
  $region16: #{pcbactiv_forward.2} parent=0 // pred_region
    _
  $region17: #{pcbactiv_forward.2} parent=0 // pred_fallthru
    _
  // Predicated region
  $region18: #{pcbactiv_forward.2} parent=0 // pred_check
    _
  $region19: #{pcbactiv_forward.2} parent=0 // pred_check_branch
    %2015 = sbr.rel (0) target = $region21
  $region20: #{pcbactiv_forward.2} parent=0 // pred_region
    _
  $region21: #{pcbactiv_forward.2} parent=0 // pred_fallthru
    _
  // Predicated region
  $region22: #{pcbactiv_forward.2} parent=0 // pred_check
    _
  $region23: #{pcbactiv_forward.2} parent=0 // pred_check_branch
    %2017 = sbr.rel (0) target = $region25
  $region24: #{pcbactiv_forward.2} parent=0 // pred_region
    _
  $region25: #{pcbactiv_forward.2} parent=0 // pred_fallthru
    _
  // Predicated region
  $region26: #{pcbactiv_forward.2} parent=0 // pred_check
    _
  $region27: #{pcbactiv_forward.2} parent=0 // pred_check_branch
    %2019 = sbr.rel (0) target = $region29
  $region28: #{pcbactiv_forward.2} parent=0 // pred_region
    _
  $region29: #{pcbactiv_forward.2} parent=0 // pred_fallthru
    _

</llo_original>
